<compile_context>
chip_gen: v5e
topology: v5e:2x2
jax: 0.10.0
libtpu: 0.0.40
codegen_flags: <defaults>
</compile_context>

<pallas_src>
import math

import jax
import jax.numpy as jnp
from jax.experimental import pallas as pl
from jax.experimental.pallas import tpu as pltpu

# ----------------------------- model config ---------------------------------
B = 2          # batch
S = 8          # sequence length
H = 32         # hidden size
NH = 2         # attention heads
HD = H // NH   # head dim
INTER = 64     # FFN intermediate size
V = 128        # vocab size
L = 2          # encoder layers
LN_EPS = 1e-5
ATT_SCALE = 1.0 / math.sqrt(HD)


# ----------------------------- in-kernel helpers ------------------------------
def _gelu_tanh(x):
    # TODO(synk): roberta-base uses erf-GELU; tanh approximation kept here.
    c = math.sqrt(2.0 / math.pi)
    return 0.5 * x * (1.0 + jnp.tanh(c * (x + 0.044715 * x * x * x)))


def _layernorm(v, g, b):
    mu = jnp.mean(v, axis=-1, keepdims=True)
    var = jnp.mean((v - mu) * (v - mu), axis=-1, keepdims=True)
    return (v - mu) * jax.lax.rsqrt(var + LN_EPS) * g + b


# ----------------------------- fused Pallas kernel ----------------------------
def fused_forward_kernel(
    h_ref, mask_ref, labels_ref,
    emb_g_ref, emb_b_ref,
    wqkv_ref, bqkv_ref, wo_ref, bo_ref, ln1_g_ref, ln1_b_ref,
    wi_ref, bi_ref, wo2_ref, bo2_ref, ln2_g_ref, ln2_b_ref,
    lm_dense_w_ref, lm_dense_b_ref, lm_ln_g_ref, lm_ln_b_ref,
    lm_dec_w_ref, lm_dec_b_ref,
    logits_ref, nll_ref,
):
    """One grid step == one batch element; everything stays resident in VMEM."""
    # embeddings LayerNorm (plain LN, no zeros-residual DMA)
    h = _layernorm(h_ref[0], emb_g_ref[...], emb_b_ref[...])      # (S, H)
    bias = mask_ref[0]                                            # (1, S) additive mask

    for l in range(L):                                            # static unrolled
        # packed QKV projection: one (S,H)x(H,3H) matmul instead of three
        qkv = jnp.dot(h, wqkv_ref[l], preferred_element_type=jnp.float32) + bqkv_ref[l]
        wo_l = wo_ref[l]                                          # (H, H)
        attn_out = jnp.zeros((S, H), jnp.float32) + bo_ref[l]     # (S, H)
        # all heads in this grid step; output-proj folded per head (no concat)
        for hh in range(NH):
            qh = qkv[:, hh * HD:(hh + 1) * HD]                    # (S, HD)
            kh = qkv[:, H + hh * HD:H + (hh + 1) * HD]            # (S, HD)
            vh = qkv[:, 2 * H + hh * HD:2 * H + (hh + 1) * HD]    # (S, HD)
            s = jax.lax.dot_general(
                qh, kh, (((1,), (1,)), ((), ())),
                preferred_element_type=jnp.float32) * ATT_SCALE + bias
            s = s - jnp.max(s, axis=-1, keepdims=True)
            p = jnp.exp(s)
            p = p / jnp.sum(p, axis=-1, keepdims=True)
            ctx = jnp.dot(p, vh, preferred_element_type=jnp.float32)      # (S, HD)
            attn_out = attn_out + jnp.dot(
                ctx, wo_l[hh * HD:(hh + 1) * HD, :],
                preferred_element_type=jnp.float32)
        # fused residual-add + LayerNorm epilogue
        h = _layernorm(attn_out + h, ln1_g_ref[l], ln1_b_ref[l])
        # FFN with fused GELU and residual+LN epilogue
        inter = _gelu_tanh(
            jnp.dot(h, wi_ref[l], preferred_element_type=jnp.float32) + bi_ref[l])
        ffn = jnp.dot(inter, wo2_ref[l], preferred_element_type=jnp.float32) + bo2_ref[l]
        h = _layernorm(ffn + h, ln2_g_ref[l], ln2_b_ref[l])

    # LM head: dense -> gelu -> LN -> decoder to vocab (all fused)
    y = _gelu_tanh(
        jnp.dot(h, lm_dense_w_ref[...], preferred_element_type=jnp.float32)
        + lm_dense_b_ref[...])
    y = _layernorm(y, lm_ln_g_ref[...], lm_ln_b_ref[...])
    logits = jnp.dot(y, lm_dec_w_ref[...], preferred_element_type=jnp.float32) \
        + lm_dec_b_ref[...]                                        # (S, V)
    logits_ref[0] = logits

    # fused cross-entropy per-token NLL (logits never leave VMEM before this)
    labels = labels_ref[0]                                         # (S, 1) int32
    m = jnp.max(logits, axis=-1, keepdims=True)
    lse = jnp.log(jnp.sum(jnp.exp(logits - m), axis=-1, keepdims=True)) + m
    logp = logits - lse
    col = jax.lax.broadcasted_iota(jnp.int32, logits.shape, 1)
    onehot = (col == labels).astype(jnp.float32)                   # -100 -> all-zero row
    nll_ref[0] = -jnp.sum(logp * onehot, axis=-1, keepdims=True)


# ----------------------------- spec helpers -----------------------------------
def _batch_spec(shape):
    """Leading axis blocked per grid step, rest full."""
    rest = len(shape) - 1
    return pl.BlockSpec((1,) + tuple(shape[1:]),
                        lambda b, _r=rest: (b,) + (0,) * _r)


def _shared_spec(shape):
    """Whole array, same block for every grid step (weights)."""
    nd = len(shape)
    return pl.BlockSpec(tuple(shape), lambda b, _n=nd: (0,) * _n)


# ----------------------------- parameters ------------------------------------
def build_params(key):
    def nrm(k, shape):
        return (0.02 * jax.random.normal(k, shape)).astype(jnp.float32)

    keys = iter(jax.random.split(key, 32))
    params = {
        "pos_emb": nrm(next(keys), (S + 2, H)),   # roberta positions start at 2
        "tok_emb": nrm(next(keys), (1, H)),
        "emb_ln_g": jnp.ones((1, H), jnp.float32),
        "emb_ln_b": jnp.zeros((1, H), jnp.float32),
        # per-layer weights stacked along a leading L axis
        "wqkv": nrm(next(keys), (L, H, 3 * H)),   # packed Q/K/V projection
        "bqkv": jnp.zeros((L, 1, 3 * H), jnp.float32),
        "wo": nrm(next(keys), (L, H, H)),
        "bo": jnp.zeros((L, 1, H), jnp.float32),
        "ln1_g": jnp.ones((L, 1, H), jnp.float32),
        "ln1_b": jnp.zeros((L, 1, H), jnp.float32),
        "wi": nrm(next(keys), (L, H, INTER)),
        "bi": jnp.zeros((L, 1, INTER), jnp.float32),
        "wo2": nrm(next(keys), (L, INTER, H)),
        "bo2": jnp.zeros((L, 1, H), jnp.float32),
        "ln2_g": jnp.ones((L, 1, H), jnp.float32),
        "ln2_b": jnp.zeros((L, 1, H), jnp.float32),
        # LM head
        "lm_dense_w": nrm(next(keys), (H, H)),
        "lm_dense_b": jnp.zeros((1, H), jnp.float32),
        "lm_ln_g": jnp.ones((1, H), jnp.float32),
        "lm_ln_b": jnp.zeros((1, H), jnp.float32),
        "lm_dec_w": nrm(next(keys), (H, V)),
        "lm_dec_b": jnp.zeros((1, V), jnp.float32),
    }
    return params


# ----------------------------- forward pass -----------------------------------
def inversion_plm_forward(params, x, labels, attention_mask):
    """x: (B, S, H) inputs_embeds, labels: (B, S) int32, attention_mask: (B, S).

    Returns (logits (B, S, V), scalar cross-entropy loss) -- same contract as
    InversionPLM.forward (ignore_index = -100, mean over valid tokens).
    """
    # embeddings add (trivial elementwise; single XLA fusion, not a kernel launch)
    pos = params["pos_emb"][2:2 + S]                    # (S, H) roberta position offset
    tok = params["tok_emb"][0]                          # (H,)
    h = (x + pos[None, :, :] + tok[None, None, :]).astype(jnp.float32)

    # extended additive attention mask bias: (B, 1, S)
    mask_bias = ((1.0 - attention_mask.astype(jnp.float32)) * -1e9).reshape(B, 1, S)
    labels3 = labels.reshape(B, S, 1).astype(jnp.int32)

    weight_order = [
        "emb_ln_g", "emb_ln_b",
        "wqkv", "bqkv", "wo", "bo", "ln1_g", "ln1_b",
        "wi", "bi", "wo2", "bo2", "ln2_g", "ln2_b",
        "lm_dense_w", "lm_dense_b", "lm_ln_g", "lm_ln_b",
        "lm_dec_w", "lm_dec_b",
    ]
    weights = [params[k] for k in weight_order]

    inputs = [h, mask_bias, labels3] + weights
    in_specs = (
        [_batch_spec(h.shape), _batch_spec(mask_bias.shape), _batch_spec(labels3.shape)]
        + [_shared_spec(w.shape) for w in weights]
    )

    # advisory cost estimate for XLA scheduling
    flops_layer = (2 * S * H * 3 * H          # packed QKV proj
                   + 4 * S * S * H            # scores + p@v over all heads
                   + 2 * S * H * H            # output projection
                   + 4 * S * H * INTER)       # FFN up + down
    flops = B * (L * flops_layer + 2 * S * H * H + 2 * S * H * V)
    transcendentals = B * (L * (NH * S * S + S * INTER) + S * H + S * V)
    bytes_accessed = sum(int(a.size) * a.dtype.itemsize for a in inputs)
    bytes_accessed += B * S * V * 4 + B * S * 4  # logits + nll outputs

    logits, nll = pl.pallas_call(
        fused_forward_kernel,
        out_shape=(jax.ShapeDtypeStruct((B, S, V), jnp.float32),
                   jax.ShapeDtypeStruct((B, S, 1), jnp.float32)),
        grid=(B,),
        in_specs=in_specs,
        out_specs=(_batch_spec((B, S, V)), _batch_spec((B, S, 1))),
        compiler_params=pltpu.CompilerParams(
            dimension_semantics=("parallel",)),   # lets v7x shard batch over 2 TCs
        cost_estimate=pl.CostEstimate(flops=flops,
                                      transcendentals=transcendentals,
                                      bytes_accessed=bytes_accessed),
    )(*inputs)

    # cross-entropy reduction (mean over non-ignored labels, ignore_index = -100)
    valid = (labels3 != -100).astype(jnp.float32)
    loss = jnp.sum(nll * valid) / jnp.maximum(jnp.sum(valid), 1.0)

    return logits, loss


# ----------------------------- driver -----------------------------------------
if __name__ == "__main__":
    key = jax.random.PRNGKey(0)
    k_param, k_x, k_lbl = jax.random.split(key, 3)

    params = build_params(k_param)
    x = jax.random.normal(k_x, (B, S, H), dtype=jnp.float32)           # inputs_embeds
    labels = jax.random.randint(k_lbl, (B, S), 0, V, dtype=jnp.int32)  # token labels
    attention_mask = jnp.ones((B, S), dtype=jnp.int32)

    logits, loss = jax.jit(inversion_plm_forward)(params, x, labels, attention_mask)
    jax.block_until_ready((logits, loss))

    assert logits.shape == (B, S, V)
    assert loss.shape == ()
    assert bool(jnp.isfinite(loss))
    print("KERNEL_OK")
</pallas_src>

<mosaic_0001>
module attributes {stable_mosaic.version = 11 : i64} {
  func.func @fused_forward_kernel(%arg0: i32, %arg1: memref<1x8x32xf32, #tpu.memory_space<vmem>>, %arg2: memref<1x1x8xf32, #tpu.memory_space<vmem>>, %arg3: memref<1x8x1xi32, #tpu.memory_space<vmem>>, %arg4: memref<1x32xf32, #tpu.memory_space<vmem>>, %arg5: memref<1x32xf32, #tpu.memory_space<vmem>>, %arg6: memref<2x32x96xf32, #tpu.memory_space<vmem>>, %arg7: memref<2x1x96xf32, #tpu.memory_space<vmem>>, %arg8: memref<2x32x32xf32, #tpu.memory_space<vmem>>, %arg9: memref<2x1x32xf32, #tpu.memory_space<vmem>>, %arg10: memref<2x1x32xf32, #tpu.memory_space<vmem>>, %arg11: memref<2x1x32xf32, #tpu.memory_space<vmem>>, %arg12: memref<2x32x64xf32, #tpu.memory_space<vmem>>, %arg13: memref<2x1x64xf32, #tpu.memory_space<vmem>>, %arg14: memref<2x64x32xf32, #tpu.memory_space<vmem>>, %arg15: memref<2x1x32xf32, #tpu.memory_space<vmem>>, %arg16: memref<2x1x32xf32, #tpu.memory_space<vmem>>, %arg17: memref<2x1x32xf32, #tpu.memory_space<vmem>>, %arg18: memref<32x32xf32, #tpu.memory_space<vmem>>, %arg19: memref<1x32xf32, #tpu.memory_space<vmem>>, %arg20: memref<1x32xf32, #tpu.memory_space<vmem>>, %arg21: memref<1x32xf32, #tpu.memory_space<vmem>>, %arg22: memref<32x128xf32, #tpu.memory_space<vmem>>, %arg23: memref<1x128xf32, #tpu.memory_space<vmem>>, %arg24: memref<1x8x128xf32, #tpu.memory_space<vmem>>, %arg25: memref<1x8x1xf32, #tpu.memory_space<vmem>>) attributes {dimension_semantics = [#tpu.dimension_semantics<parallel>], iteration_bounds = array<i64: 2>, scalar_prefetch = 0 : i64, scratch_operands = 0 : i64, tpu.core_type = #tpu.core_type<tc>, window_params = [{transform_indices = @transform_0, window_bounds = array<i64: 1, 8, 32>}, {transform_indices = @transform_1, window_bounds = array<i64: 1, 1, 8>}, {transform_indices = @transform_2, window_bounds = array<i64: 1, 8, 1>}, {pipeline_mode = #tpu.pipeline_mode<synchronous>, transform_indices = @transform_3, window_bounds = array<i64: 1, 32>}, {pipeline_mode = #tpu.pipeline_mode<synchronous>, transform_indices = @transform_4, window_bounds = array<i64: 1, 32>}, {pipeline_mode = #tpu.pipeline_mode<synchronous>, transform_indices = @transform_5, window_bounds = array<i64: 2, 32, 96>}, {pipeline_mode = #tpu.pipeline_mode<synchronous>, transform_indices = @transform_6, window_bounds = array<i64: 2, 1, 96>}, {pipeline_mode = #tpu.pipeline_mode<synchronous>, transform_indices = @transform_7, window_bounds = array<i64: 2, 32, 32>}, {pipeline_mode = #tpu.pipeline_mode<synchronous>, transform_indices = @transform_8, window_bounds = array<i64: 2, 1, 32>}, {pipeline_mode = #tpu.pipeline_mode<synchronous>, transform_indices = @transform_9, window_bounds = array<i64: 2, 1, 32>}, {pipeline_mode = #tpu.pipeline_mode<synchronous>, transform_indices = @transform_10, window_bounds = array<i64: 2, 1, 32>}, {pipeline_mode = #tpu.pipeline_mode<synchronous>, transform_indices = @transform_11, window_bounds = array<i64: 2, 32, 64>}, {pipeline_mode = #tpu.pipeline_mode<synchronous>, transform_indices = @transform_12, window_bounds = array<i64: 2, 1, 64>}, {pipeline_mode = #tpu.pipeline_mode<synchronous>, transform_indices = @transform_13, window_bounds = array<i64: 2, 64, 32>}, {pipeline_mode = #tpu.pipeline_mode<synchronous>, transform_indices = @transform_14, window_bounds = array<i64: 2, 1, 32>}, {pipeline_mode = #tpu.pipeline_mode<synchronous>, transform_indices = @transform_15, window_bounds = array<i64: 2, 1, 32>}, {pipeline_mode = #tpu.pipeline_mode<synchronous>, transform_indices = @transform_16, window_bounds = array<i64: 2, 1, 32>}, {pipeline_mode = #tpu.pipeline_mode<synchronous>, transform_indices = @transform_17, window_bounds = array<i64: 32, 32>}, {pipeline_mode = #tpu.pipeline_mode<synchronous>, transform_indices = @transform_18, window_bounds = array<i64: 1, 32>}, {pipeline_mode = #tpu.pipeline_mode<synchronous>, transform_indices = @transform_19, window_bounds = array<i64: 1, 32>}, {pipeline_mode = #tpu.pipeline_mode<synchronous>, transform_indices = @transform_20, window_bounds = array<i64: 1, 32>}, {pipeline_mode = #tpu.pipeline_mode<synchronous>, transform_indices = @transform_21, window_bounds = array<i64: 32, 128>}, {pipeline_mode = #tpu.pipeline_mode<synchronous>, transform_indices = @transform_22, window_bounds = array<i64: 1, 128>}, {transform_indices = @transform_23, window_bounds = array<i64: 1, 8, 128>}, {transform_indices = @transform_24, window_bounds = array<i64: 1, 8, 1>}]} {
    %c0 = arith.constant 0 : index
    %c0_0 = arith.constant 0 : index
    %c0_1 = arith.constant 0 : index
    %0 = vector.load %arg1[%c0, %c0_0, %c0_1] : memref<1x8x32xf32, #tpu.memory_space<vmem>>, vector<1x8x32xf32>
    %1 = vector.shape_cast %0 : vector<1x8x32xf32> to vector<8x32xf32>
    %c0_2 = arith.constant 0 : index
    %c0_3 = arith.constant 0 : index
    %2 = vector.load %arg4[%c0_2, %c0_3] : memref<1x32xf32, #tpu.memory_space<vmem>>, vector<1x32xf32>
    %c0_4 = arith.constant 0 : index
    %c0_5 = arith.constant 0 : index
    %3 = vector.load %arg5[%c0_4, %c0_5] : memref<1x32xf32, #tpu.memory_space<vmem>>, vector<1x32xf32>
    %cst = arith.constant dense<0.000000e+00> : vector<8xf32>
    %4 = vector.multi_reduction <add>, %1, %cst [1] : vector<8x32xf32> to vector<8xf32>
    %5 = vector.shape_cast %4 : vector<8xf32> to vector<8x1xf32>
    %cst_6 = arith.constant 3.200000e+01 : f32
    %6 = vector.broadcast %cst_6 : f32 to vector<8x1xf32>
    %7 = arith.divf %5, %6 : vector<8x1xf32>
    %8 = vector.broadcast %7 : vector<8x1xf32> to vector<8x32xf32>
    %9 = arith.subf %1, %8 : vector<8x32xf32>
    %10 = vector.broadcast %7 : vector<8x1xf32> to vector<8x32xf32>
    %11 = arith.subf %1, %10 : vector<8x32xf32>
    %12 = arith.mulf %9, %11 : vector<8x32xf32>
    %cst_7 = arith.constant dense<0.000000e+00> : vector<8xf32>
    %13 = vector.multi_reduction <add>, %12, %cst_7 [1] : vector<8x32xf32> to vector<8xf32>
    %14 = vector.shape_cast %13 : vector<8xf32> to vector<8x1xf32>
    %cst_8 = arith.constant 3.200000e+01 : f32
    %15 = vector.broadcast %cst_8 : f32 to vector<8x1xf32>
    %16 = arith.divf %14, %15 : vector<8x1xf32>
    %17 = vector.broadcast %7 : vector<8x1xf32> to vector<8x32xf32>
    %18 = arith.subf %1, %17 : vector<8x32xf32>
    %cst_9 = arith.constant 9.99999974E-6 : f32
    %19 = vector.broadcast %cst_9 : f32 to vector<8x1xf32>
    %20 = arith.addf %16, %19 : vector<8x1xf32>
    %21 = math.rsqrt %20 : vector<8x1xf32>
    %22 = vector.broadcast %21 : vector<8x1xf32> to vector<8x32xf32>
    %23 = arith.mulf %18, %22 : vector<8x32xf32>
    %24 = vector.broadcast %2 : vector<1x32xf32> to vector<8x32xf32>
    %25 = arith.mulf %23, %24 : vector<8x32xf32>
    %26 = vector.broadcast %3 : vector<1x32xf32> to vector<8x32xf32>
    %27 = arith.addf %25, %26 : vector<8x32xf32>
    %c0_10 = arith.constant 0 : index
    %c0_11 = arith.constant 0 : index
    %c0_12 = arith.constant 0 : index
    %28 = vector.load %arg2[%c0_10, %c0_11, %c0_12] : memref<1x1x8xf32, #tpu.memory_space<vmem>>, vector<1x1x8xf32>
    %29 = vector.shape_cast %28 : vector<1x1x8xf32> to vector<1x8xf32>
    %c0_13 = arith.constant 0 : index
    %c0_14 = arith.constant 0 : index
    %c0_15 = arith.constant 0 : index
    %30 = vector.load %arg6[%c0_13, %c0_14, %c0_15] : memref<2x32x96xf32, #tpu.memory_space<vmem>>, vector<1x32x96xf32>
    %31 = vector.shape_cast %30 : vector<1x32x96xf32> to vector<32x96xf32>
    %cst_16 = arith.constant dense<0.000000e+00> : vector<8x96xf32>
    %32 = tpu.matmul %27, %31, %cst_16 {dimension_numbers = #tpu.dot_dimension_numbers<[1], [0], [0], [1], [0, 0, 1, 1], [], []>} : vector<8x32xf32>, vector<32x96xf32>, vector<8x96xf32> -> vector<8x96xf32>
    %c0_17 = arith.constant 0 : index
    %c0_18 = arith.constant 0 : index
    %c0_19 = arith.constant 0 : index
    %33 = vector.load %arg7[%c0_17, %c0_18, %c0_19] : memref<2x1x96xf32, #tpu.memory_space<vmem>>, vector<1x1x96xf32>
    %34 = vector.shape_cast %33 : vector<1x1x96xf32> to vector<1x96xf32>
    %35 = vector.broadcast %34 : vector<1x96xf32> to vector<8x96xf32>
    %36 = arith.addf %32, %35 : vector<8x96xf32>
    %c0_20 = arith.constant 0 : index
    %c0_21 = arith.constant 0 : index
    %c0_22 = arith.constant 0 : index
    %37 = vector.load %arg8[%c0_20, %c0_21, %c0_22] : memref<2x32x32xf32, #tpu.memory_space<vmem>>, vector<1x32x32xf32>
    %38 = vector.shape_cast %37 : vector<1x32x32xf32> to vector<32x32xf32>
    %cst_23 = arith.constant 0.000000e+00 : f32
    %39 = vector.broadcast %cst_23 : f32 to vector<8x32xf32>
    %c0_24 = arith.constant 0 : index
    %c0_25 = arith.constant 0 : index
    %c0_26 = arith.constant 0 : index
    %40 = vector.load %arg9[%c0_24, %c0_25, %c0_26] : memref<2x1x32xf32, #tpu.memory_space<vmem>>, vector<1x1x32xf32>
    %41 = vector.shape_cast %40 : vector<1x1x32xf32> to vector<1x32xf32>
    %42 = vector.broadcast %41 : vector<1x32xf32> to vector<8x32xf32>
    %43 = arith.addf %39, %42 : vector<8x32xf32>
    %44 = vector.extract_strided_slice %36 {offsets = [0, 0], sizes = [8, 16], strides = [1, 1]} : vector<8x96xf32> to vector<8x16xf32>
    %45 = vector.extract_strided_slice %36 {offsets = [0, 32], sizes = [8, 16], strides = [1, 1]} : vector<8x96xf32> to vector<8x16xf32>
    %46 = vector.extract_strided_slice %36 {offsets = [0, 64], sizes = [8, 16], strides = [1, 1]} : vector<8x96xf32> to vector<8x16xf32>
    %cst_27 = arith.constant dense<0.000000e+00> : vector<8x8xf32>
    %47 = tpu.matmul %44, %45, %cst_27 {dimension_numbers = #tpu.dot_dimension_numbers<[1], [1], [0], [0], [0, 0, 1, 0], [], []>} : vector<8x16xf32>, vector<8x16xf32>, vector<8x8xf32> -> vector<8x8xf32>
    %cst_28 = arith.constant 2.500000e-01 : f32
    %48 = vector.broadcast %cst_28 : f32 to vector<8x8xf32>
    %49 = arith.mulf %47, %48 : vector<8x8xf32>
    %50 = vector.broadcast %29 : vector<1x8xf32> to vector<8x8xf32>
    %51 = arith.addf %49, %50 : vector<8x8xf32>
    %cst_29 = arith.constant dense<0xFF800000> : vector<8xf32>
    %52 = vector.multi_reduction <maximumf>, %51, %cst_29 [1] : vector<8x8xf32> to vector<8xf32>
    %53 = vector.shape_cast %52 : vector<8xf32> to vector<8x1xf32>
    %54 = vector.broadcast %53 : vector<8x1xf32> to vector<8x8xf32>
    %55 = arith.subf %51, %54 : vector<8x8xf32>
    %56 = math.exp %55 : vector<8x8xf32>
    %cst_30 = arith.constant dense<0.000000e+00> : vector<8xf32>
    %57 = vector.multi_reduction <add>, %56, %cst_30 [1] : vector<8x8xf32> to vector<8xf32>
    %58 = vector.shape_cast %57 : vector<8xf32> to vector<8x1xf32>
    %59 = vector.broadcast %58 : vector<8x1xf32> to vector<8x8xf32>
    %60 = arith.divf %56, %59 : vector<8x8xf32>
    %cst_31 = arith.constant dense<0.000000e+00> : vector<8x16xf32>
    %61 = tpu.matmul %60, %46, %cst_31 {dimension_numbers = #tpu.dot_dimension_numbers<[1], [0], [0], [1], [0, 0, 1, 1], [], []>} : vector<8x8xf32>, vector<8x16xf32>, vector<8x16xf32> -> vector<8x16xf32>
    %62 = vector.extract_strided_slice %38 {offsets = [0, 0], sizes = [16, 32], strides = [1, 1]} : vector<32x32xf32> to vector<16x32xf32>
    %cst_32 = arith.constant dense<0.000000e+00> : vector<8x32xf32>
    %63 = tpu.matmul %61, %62, %cst_32 {dimension_numbers = #tpu.dot_dimension_numbers<[1], [0], [0], [1], [0, 0, 1, 1], [], []>} : vector<8x16xf32>, vector<16x32xf32>, vector<8x32xf32> -> vector<8x32xf32>
    %64 = arith.addf %43, %63 : vector<8x32xf32>
    %65 = vector.extract_strided_slice %36 {offsets = [0, 16], sizes = [8, 16], strides = [1, 1]} : vector<8x96xf32> to vector<8x16xf32>
    %66 = vector.extract_strided_slice %36 {offsets = [0, 48], sizes = [8, 16], strides = [1, 1]} : vector<8x96xf32> to vector<8x16xf32>
    %67 = vector.extract_strided_slice %36 {offsets = [0, 80], sizes = [8, 16], strides = [1, 1]} : vector<8x96xf32> to vector<8x16xf32>
    %cst_33 = arith.constant dense<0.000000e+00> : vector<8x8xf32>
    %68 = tpu.matmul %65, %66, %cst_33 {dimension_numbers = #tpu.dot_dimension_numbers<[1], [1], [0], [0], [0, 0, 1, 0], [], []>} : vector<8x16xf32>, vector<8x16xf32>, vector<8x8xf32> -> vector<8x8xf32>
    %cst_34 = arith.constant 2.500000e-01 : f32
    %69 = vector.broadcast %cst_34 : f32 to vector<8x8xf32>
    %70 = arith.mulf %68, %69 : vector<8x8xf32>
    %71 = vector.broadcast %29 : vector<1x8xf32> to vector<8x8xf32>
    %72 = arith.addf %70, %71 : vector<8x8xf32>
    %cst_35 = arith.constant dense<0xFF800000> : vector<8xf32>
    %73 = vector.multi_reduction <maximumf>, %72, %cst_35 [1] : vector<8x8xf32> to vector<8xf32>
    %74 = vector.shape_cast %73 : vector<8xf32> to vector<8x1xf32>
    %75 = vector.broadcast %74 : vector<8x1xf32> to vector<8x8xf32>
    %76 = arith.subf %72, %75 : vector<8x8xf32>
    %77 = math.exp %76 : vector<8x8xf32>
    %cst_36 = arith.constant dense<0.000000e+00> : vector<8xf32>
    %78 = vector.multi_reduction <add>, %77, %cst_36 [1] : vector<8x8xf32> to vector<8xf32>
    %79 = vector.shape_cast %78 : vector<8xf32> to vector<8x1xf32>
    %80 = vector.broadcast %79 : vector<8x1xf32> to vector<8x8xf32>
    %81 = arith.divf %77, %80 : vector<8x8xf32>
    %cst_37 = arith.constant dense<0.000000e+00> : vector<8x16xf32>
    %82 = tpu.matmul %81, %67, %cst_37 {dimension_numbers = #tpu.dot_dimension_numbers<[1], [0], [0], [1], [0, 0, 1, 1], [], []>} : vector<8x8xf32>, vector<8x16xf32>, vector<8x16xf32> -> vector<8x16xf32>
    %83 = vector.extract_strided_slice %38 {offsets = [16, 0], sizes = [16, 32], strides = [1, 1]} : vector<32x32xf32> to vector<16x32xf32>
    %cst_38 = arith.constant dense<0.000000e+00> : vector<8x32xf32>
    %84 = tpu.matmul %82, %83, %cst_38 {dimension_numbers = #tpu.dot_dimension_numbers<[1], [0], [0], [1], [0, 0, 1, 1], [], []>} : vector<8x16xf32>, vector<16x32xf32>, vector<8x32xf32> -> vector<8x32xf32>
    %85 = arith.addf %64, %84 : vector<8x32xf32>
    %86 = arith.addf %85, %27 : vector<8x32xf32>
    %c0_39 = arith.constant 0 : index
    %c0_40 = arith.constant 0 : index
    %c0_41 = arith.constant 0 : index
    %87 = vector.load %arg10[%c0_39, %c0_40, %c0_41] : memref<2x1x32xf32, #tpu.memory_space<vmem>>, vector<1x1x32xf32>
    %88 = vector.shape_cast %87 : vector<1x1x32xf32> to vector<1x32xf32>
    %c0_42 = arith.constant 0 : index
    %c0_43 = arith.constant 0 : index
    %c0_44 = arith.constant 0 : index
    %89 = vector.load %arg11[%c0_42, %c0_43, %c0_44] : memref<2x1x32xf32, #tpu.memory_space<vmem>>, vector<1x1x32xf32>
    %90 = vector.shape_cast %89 : vector<1x1x32xf32> to vector<1x32xf32>
    %cst_45 = arith.constant dense<0.000000e+00> : vector<8xf32>
    %91 = vector.multi_reduction <add>, %86, %cst_45 [1] : vector<8x32xf32> to vector<8xf32>
    %92 = vector.shape_cast %91 : vector<8xf32> to vector<8x1xf32>
    %cst_46 = arith.constant 3.200000e+01 : f32
    %93 = vector.broadcast %cst_46 : f32 to vector<8x1xf32>
    %94 = arith.divf %92, %93 : vector<8x1xf32>
    %95 = vector.broadcast %94 : vector<8x1xf32> to vector<8x32xf32>
    %96 = arith.subf %86, %95 : vector<8x32xf32>
    %97 = vector.broadcast %94 : vector<8x1xf32> to vector<8x32xf32>
    %98 = arith.subf %86, %97 : vector<8x32xf32>
    %99 = arith.mulf %96, %98 : vector<8x32xf32>
    %cst_47 = arith.constant dense<0.000000e+00> : vector<8xf32>
    %100 = vector.multi_reduction <add>, %99, %cst_47 [1] : vector<8x32xf32> to vector<8xf32>
    %101 = vector.shape_cast %100 : vector<8xf32> to vector<8x1xf32>
    %cst_48 = arith.constant 3.200000e+01 : f32
    %102 = vector.broadcast %cst_48 : f32 to vector<8x1xf32>
    %103 = arith.divf %101, %102 : vector<8x1xf32>
    %104 = vector.broadcast %94 : vector<8x1xf32> to vector<8x32xf32>
    %105 = arith.subf %86, %104 : vector<8x32xf32>
    %cst_49 = arith.constant 9.99999974E-6 : f32
    %106 = vector.broadcast %cst_49 : f32 to vector<8x1xf32>
    %107 = arith.addf %103, %106 : vector<8x1xf32>
    %108 = math.rsqrt %107 : vector<8x1xf32>
    %109 = vector.broadcast %108 : vector<8x1xf32> to vector<8x32xf32>
    %110 = arith.mulf %105, %109 : vector<8x32xf32>
    %111 = vector.broadcast %88 : vector<1x32xf32> to vector<8x32xf32>
    %112 = arith.mulf %110, %111 : vector<8x32xf32>
    %113 = vector.broadcast %90 : vector<1x32xf32> to vector<8x32xf32>
    %114 = arith.addf %112, %113 : vector<8x32xf32>
    %c0_50 = arith.constant 0 : index
    %c0_51 = arith.constant 0 : index
    %c0_52 = arith.constant 0 : index
    %115 = vector.load %arg12[%c0_50, %c0_51, %c0_52] : memref<2x32x64xf32, #tpu.memory_space<vmem>>, vector<1x32x64xf32>
    %116 = vector.shape_cast %115 : vector<1x32x64xf32> to vector<32x64xf32>
    %cst_53 = arith.constant dense<0.000000e+00> : vector<8x64xf32>
    %117 = tpu.matmul %114, %116, %cst_53 {dimension_numbers = #tpu.dot_dimension_numbers<[1], [0], [0], [1], [0, 0, 1, 1], [], []>} : vector<8x32xf32>, vector<32x64xf32>, vector<8x64xf32> -> vector<8x64xf32>
    %c0_54 = arith.constant 0 : index
    %c0_55 = arith.constant 0 : index
    %c0_56 = arith.constant 0 : index
    %118 = vector.load %arg13[%c0_54, %c0_55, %c0_56] : memref<2x1x64xf32, #tpu.memory_space<vmem>>, vector<1x1x64xf32>
    %119 = vector.shape_cast %118 : vector<1x1x64xf32> to vector<1x64xf32>
    %120 = vector.broadcast %119 : vector<1x64xf32> to vector<8x64xf32>
    %121 = arith.addf %117, %120 : vector<8x64xf32>
    %cst_57 = arith.constant 5.000000e-01 : f32
    %122 = vector.broadcast %cst_57 : f32 to vector<8x64xf32>
    %123 = arith.mulf %122, %121 : vector<8x64xf32>
    %cst_58 = arith.constant 4.471500e-02 : f32
    %124 = vector.broadcast %cst_58 : f32 to vector<8x64xf32>
    %125 = arith.mulf %124, %121 : vector<8x64xf32>
    %126 = arith.mulf %125, %121 : vector<8x64xf32>
    %127 = arith.mulf %126, %121 : vector<8x64xf32>
    %128 = arith.addf %121, %127 : vector<8x64xf32>
    %cst_59 = arith.constant 0.797884583 : f32
    %129 = vector.broadcast %cst_59 : f32 to vector<8x64xf32>
    %130 = arith.mulf %129, %128 : vector<8x64xf32>
    %131 = math.tanh %130 : vector<8x64xf32>
    %cst_60 = arith.constant 1.000000e+00 : f32
    %132 = vector.broadcast %cst_60 : f32 to vector<8x64xf32>
    %133 = arith.addf %132, %131 : vector<8x64xf32>
    %134 = arith.mulf %123, %133 : vector<8x64xf32>
    %c0_61 = arith.constant 0 : index
    %c0_62 = arith.constant 0 : index
    %c0_63 = arith.constant 0 : index
    %135 = vector.load %arg14[%c0_61, %c0_62, %c0_63] : memref<2x64x32xf32, #tpu.memory_space<vmem>>, vector<1x64x32xf32>
    %136 = vector.shape_cast %135 : vector<1x64x32xf32> to vector<64x32xf32>
    %cst_64 = arith.constant dense<0.000000e+00> : vector<8x32xf32>
    %137 = tpu.matmul %134, %136, %cst_64 {dimension_numbers = #tpu.dot_dimension_numbers<[1], [0], [0], [1], [0, 0, 1, 1], [], []>} : vector<8x64xf32>, vector<64x32xf32>, vector<8x32xf32> -> vector<8x32xf32>
    %c0_65 = arith.constant 0 : index
    %c0_66 = arith.constant 0 : index
    %c0_67 = arith.constant 0 : index
    %138 = vector.load %arg15[%c0_65, %c0_66, %c0_67] : memref<2x1x32xf32, #tpu.memory_space<vmem>>, vector<1x1x32xf32>
    %139 = vector.shape_cast %138 : vector<1x1x32xf32> to vector<1x32xf32>
    %140 = vector.broadcast %139 : vector<1x32xf32> to vector<8x32xf32>
    %141 = arith.addf %137, %140 : vector<8x32xf32>
    %142 = arith.addf %141, %114 : vector<8x32xf32>
    %c0_68 = arith.constant 0 : index
    %c0_69 = arith.constant 0 : index
    %c0_70 = arith.constant 0 : index
    %143 = vector.load %arg16[%c0_68, %c0_69, %c0_70] : memref<2x1x32xf32, #tpu.memory_space<vmem>>, vector<1x1x32xf32>
    %144 = vector.shape_cast %143 : vector<1x1x32xf32> to vector<1x32xf32>
    %c0_71 = arith.constant 0 : index
    %c0_72 = arith.constant 0 : index
    %c0_73 = arith.constant 0 : index
    %145 = vector.load %arg17[%c0_71, %c0_72, %c0_73] : memref<2x1x32xf32, #tpu.memory_space<vmem>>, vector<1x1x32xf32>
    %146 = vector.shape_cast %145 : vector<1x1x32xf32> to vector<1x32xf32>
    %cst_74 = arith.constant dense<0.000000e+00> : vector<8xf32>
    %147 = vector.multi_reduction <add>, %142, %cst_74 [1] : vector<8x32xf32> to vector<8xf32>
    %148 = vector.shape_cast %147 : vector<8xf32> to vector<8x1xf32>
    %cst_75 = arith.constant 3.200000e+01 : f32
    %149 = vector.broadcast %cst_75 : f32 to vector<8x1xf32>
    %150 = arith.divf %148, %149 : vector<8x1xf32>
    %151 = vector.broadcast %150 : vector<8x1xf32> to vector<8x32xf32>
    %152 = arith.subf %142, %151 : vector<8x32xf32>
    %153 = vector.broadcast %150 : vector<8x1xf32> to vector<8x32xf32>
    %154 = arith.subf %142, %153 : vector<8x32xf32>
    %155 = arith.mulf %152, %154 : vector<8x32xf32>
    %cst_76 = arith.constant dense<0.000000e+00> : vector<8xf32>
    %156 = vector.multi_reduction <add>, %155, %cst_76 [1] : vector<8x32xf32> to vector<8xf32>
    %157 = vector.shape_cast %156 : vector<8xf32> to vector<8x1xf32>
    %cst_77 = arith.constant 3.200000e+01 : f32
    %158 = vector.broadcast %cst_77 : f32 to vector<8x1xf32>
    %159 = arith.divf %157, %158 : vector<8x1xf32>
    %160 = vector.broadcast %150 : vector<8x1xf32> to vector<8x32xf32>
    %161 = arith.subf %142, %160 : vector<8x32xf32>
    %cst_78 = arith.constant 9.99999974E-6 : f32
    %162 = vector.broadcast %cst_78 : f32 to vector<8x1xf32>
    %163 = arith.addf %159, %162 : vector<8x1xf32>
    %164 = math.rsqrt %163 : vector<8x1xf32>
    %165 = vector.broadcast %164 : vector<8x1xf32> to vector<8x32xf32>
    %166 = arith.mulf %161, %165 : vector<8x32xf32>
    %167 = vector.broadcast %144 : vector<1x32xf32> to vector<8x32xf32>
    %168 = arith.mulf %166, %167 : vector<8x32xf32>
    %169 = vector.broadcast %146 : vector<1x32xf32> to vector<8x32xf32>
    %170 = arith.addf %168, %169 : vector<8x32xf32>
    %c1 = arith.constant 1 : index
    %c0_79 = arith.constant 0 : index
    %c0_80 = arith.constant 0 : index
    %171 = vector.load %arg6[%c1, %c0_79, %c0_80] : memref<2x32x96xf32, #tpu.memory_space<vmem>>, vector<1x32x96xf32>
    %172 = vector.shape_cast %171 : vector<1x32x96xf32> to vector<32x96xf32>
    %cst_81 = arith.constant dense<0.000000e+00> : vector<8x96xf32>
    %173 = tpu.matmul %170, %172, %cst_81 {dimension_numbers = #tpu.dot_dimension_numbers<[1], [0], [0], [1], [0, 0, 1, 1], [], []>} : vector<8x32xf32>, vector<32x96xf32>, vector<8x96xf32> -> vector<8x96xf32>
    %c1_82 = arith.constant 1 : index
    %c0_83 = arith.constant 0 : index
    %c0_84 = arith.constant 0 : index
    %174 = vector.load %arg7[%c1_82, %c0_83, %c0_84] : memref<2x1x96xf32, #tpu.memory_space<vmem>>, vector<1x1x96xf32>
    %175 = vector.shape_cast %174 : vector<1x1x96xf32> to vector<1x96xf32>
    %176 = vector.broadcast %175 : vector<1x96xf32> to vector<8x96xf32>
    %177 = arith.addf %173, %176 : vector<8x96xf32>
    %c1_85 = arith.constant 1 : index
    %c0_86 = arith.constant 0 : index
    %c0_87 = arith.constant 0 : index
    %178 = vector.load %arg8[%c1_85, %c0_86, %c0_87] : memref<2x32x32xf32, #tpu.memory_space<vmem>>, vector<1x32x32xf32>
    %179 = vector.shape_cast %178 : vector<1x32x32xf32> to vector<32x32xf32>
    %cst_88 = arith.constant 0.000000e+00 : f32
    %180 = vector.broadcast %cst_88 : f32 to vector<8x32xf32>
    %c1_89 = arith.constant 1 : index
    %c0_90 = arith.constant 0 : index
    %c0_91 = arith.constant 0 : index
    %181 = vector.load %arg9[%c1_89, %c0_90, %c0_91] : memref<2x1x32xf32, #tpu.memory_space<vmem>>, vector<1x1x32xf32>
    %182 = vector.shape_cast %181 : vector<1x1x32xf32> to vector<1x32xf32>
    %183 = vector.broadcast %182 : vector<1x32xf32> to vector<8x32xf32>
    %184 = arith.addf %180, %183 : vector<8x32xf32>
    %185 = vector.extract_strided_slice %177 {offsets = [0, 0], sizes = [8, 16], strides = [1, 1]} : vector<8x96xf32> to vector<8x16xf32>
    %186 = vector.extract_strided_slice %177 {offsets = [0, 32], sizes = [8, 16], strides = [1, 1]} : vector<8x96xf32> to vector<8x16xf32>
    %187 = vector.extract_strided_slice %177 {offsets = [0, 64], sizes = [8, 16], strides = [1, 1]} : vector<8x96xf32> to vector<8x16xf32>
    %cst_92 = arith.constant dense<0.000000e+00> : vector<8x8xf32>
    %188 = tpu.matmul %185, %186, %cst_92 {dimension_numbers = #tpu.dot_dimension_numbers<[1], [1], [0], [0], [0, 0, 1, 0], [], []>} : vector<8x16xf32>, vector<8x16xf32>, vector<8x8xf32> -> vector<8x8xf32>
    %cst_93 = arith.constant 2.500000e-01 : f32
    %189 = vector.broadcast %cst_93 : f32 to vector<8x8xf32>
    %190 = arith.mulf %188, %189 : vector<8x8xf32>
    %191 = vector.broadcast %29 : vector<1x8xf32> to vector<8x8xf32>
    %192 = arith.addf %190, %191 : vector<8x8xf32>
    %cst_94 = arith.constant dense<0xFF800000> : vector<8xf32>
    %193 = vector.multi_reduction <maximumf>, %192, %cst_94 [1] : vector<8x8xf32> to vector<8xf32>
    %194 = vector.shape_cast %193 : vector<8xf32> to vector<8x1xf32>
    %195 = vector.broadcast %194 : vector<8x1xf32> to vector<8x8xf32>
    %196 = arith.subf %192, %195 : vector<8x8xf32>
    %197 = math.exp %196 : vector<8x8xf32>
    %cst_95 = arith.constant dense<0.000000e+00> : vector<8xf32>
    %198 = vector.multi_reduction <add>, %197, %cst_95 [1] : vector<8x8xf32> to vector<8xf32>
    %199 = vector.shape_cast %198 : vector<8xf32> to vector<8x1xf32>
    %200 = vector.broadcast %199 : vector<8x1xf32> to vector<8x8xf32>
    %201 = arith.divf %197, %200 : vector<8x8xf32>
    %cst_96 = arith.constant dense<0.000000e+00> : vector<8x16xf32>
    %202 = tpu.matmul %201, %187, %cst_96 {dimension_numbers = #tpu.dot_dimension_numbers<[1], [0], [0], [1], [0, 0, 1, 1], [], []>} : vector<8x8xf32>, vector<8x16xf32>, vector<8x16xf32> -> vector<8x16xf32>
    %203 = vector.extract_strided_slice %179 {offsets = [0, 0], sizes = [16, 32], strides = [1, 1]} : vector<32x32xf32> to vector<16x32xf32>
    %cst_97 = arith.constant dense<0.000000e+00> : vector<8x32xf32>
    %204 = tpu.matmul %202, %203, %cst_97 {dimension_numbers = #tpu.dot_dimension_numbers<[1], [0], [0], [1], [0, 0, 1, 1], [], []>} : vector<8x16xf32>, vector<16x32xf32>, vector<8x32xf32> -> vector<8x32xf32>
    %205 = arith.addf %184, %204 : vector<8x32xf32>
    %206 = vector.extract_strided_slice %177 {offsets = [0, 16], sizes = [8, 16], strides = [1, 1]} : vector<8x96xf32> to vector<8x16xf32>
    %207 = vector.extract_strided_slice %177 {offsets = [0, 48], sizes = [8, 16], strides = [1, 1]} : vector<8x96xf32> to vector<8x16xf32>
    %208 = vector.extract_strided_slice %177 {offsets = [0, 80], sizes = [8, 16], strides = [1, 1]} : vector<8x96xf32> to vector<8x16xf32>
    %cst_98 = arith.constant dense<0.000000e+00> : vector<8x8xf32>
    %209 = tpu.matmul %206, %207, %cst_98 {dimension_numbers = #tpu.dot_dimension_numbers<[1], [1], [0], [0], [0, 0, 1, 0], [], []>} : vector<8x16xf32>, vector<8x16xf32>, vector<8x8xf32> -> vector<8x8xf32>
    %cst_99 = arith.constant 2.500000e-01 : f32
    %210 = vector.broadcast %cst_99 : f32 to vector<8x8xf32>
    %211 = arith.mulf %209, %210 : vector<8x8xf32>
    %212 = vector.broadcast %29 : vector<1x8xf32> to vector<8x8xf32>
    %213 = arith.addf %211, %212 : vector<8x8xf32>
    %cst_100 = arith.constant dense<0xFF800000> : vector<8xf32>
    %214 = vector.multi_reduction <maximumf>, %213, %cst_100 [1] : vector<8x8xf32> to vector<8xf32>
    %215 = vector.shape_cast %214 : vector<8xf32> to vector<8x1xf32>
    %216 = vector.broadcast %215 : vector<8x1xf32> to vector<8x8xf32>
    %217 = arith.subf %213, %216 : vector<8x8xf32>
    %218 = math.exp %217 : vector<8x8xf32>
    %cst_101 = arith.constant dense<0.000000e+00> : vector<8xf32>
    %219 = vector.multi_reduction <add>, %218, %cst_101 [1] : vector<8x8xf32> to vector<8xf32>
    %220 = vector.shape_cast %219 : vector<8xf32> to vector<8x1xf32>
    %221 = vector.broadcast %220 : vector<8x1xf32> to vector<8x8xf32>
    %222 = arith.divf %218, %221 : vector<8x8xf32>
    %cst_102 = arith.constant dense<0.000000e+00> : vector<8x16xf32>
    %223 = tpu.matmul %222, %208, %cst_102 {dimension_numbers = #tpu.dot_dimension_numbers<[1], [0], [0], [1], [0, 0, 1, 1], [], []>} : vector<8x8xf32>, vector<8x16xf32>, vector<8x16xf32> -> vector<8x16xf32>
    %224 = vector.extract_strided_slice %179 {offsets = [16, 0], sizes = [16, 32], strides = [1, 1]} : vector<32x32xf32> to vector<16x32xf32>
    %cst_103 = arith.constant dense<0.000000e+00> : vector<8x32xf32>
    %225 = tpu.matmul %223, %224, %cst_103 {dimension_numbers = #tpu.dot_dimension_numbers<[1], [0], [0], [1], [0, 0, 1, 1], [], []>} : vector<8x16xf32>, vector<16x32xf32>, vector<8x32xf32> -> vector<8x32xf32>
    %226 = arith.addf %205, %225 : vector<8x32xf32>
    %227 = arith.addf %226, %170 : vector<8x32xf32>
    %c1_104 = arith.constant 1 : index
    %c0_105 = arith.constant 0 : index
    %c0_106 = arith.constant 0 : index
    %228 = vector.load %arg10[%c1_104, %c0_105, %c0_106] : memref<2x1x32xf32, #tpu.memory_space<vmem>>, vector<1x1x32xf32>
    %229 = vector.shape_cast %228 : vector<1x1x32xf32> to vector<1x32xf32>
    %c1_107 = arith.constant 1 : index
    %c0_108 = arith.constant 0 : index
    %c0_109 = arith.constant 0 : index
    %230 = vector.load %arg11[%c1_107, %c0_108, %c0_109] : memref<2x1x32xf32, #tpu.memory_space<vmem>>, vector<1x1x32xf32>
    %231 = vector.shape_cast %230 : vector<1x1x32xf32> to vector<1x32xf32>
    %cst_110 = arith.constant dense<0.000000e+00> : vector<8xf32>
    %232 = vector.multi_reduction <add>, %227, %cst_110 [1] : vector<8x32xf32> to vector<8xf32>
    %233 = vector.shape_cast %232 : vector<8xf32> to vector<8x1xf32>
    %cst_111 = arith.constant 3.200000e+01 : f32
    %234 = vector.broadcast %cst_111 : f32 to vector<8x1xf32>
    %235 = arith.divf %233, %234 : vector<8x1xf32>
    %236 = vector.broadcast %235 : vector<8x1xf32> to vector<8x32xf32>
    %237 = arith.subf %227, %236 : vector<8x32xf32>
    %238 = vector.broadcast %235 : vector<8x1xf32> to vector<8x32xf32>
    %239 = arith.subf %227, %238 : vector<8x32xf32>
    %240 = arith.mulf %237, %239 : vector<8x32xf32>
    %cst_112 = arith.constant dense<0.000000e+00> : vector<8xf32>
    %241 = vector.multi_reduction <add>, %240, %cst_112 [1] : vector<8x32xf32> to vector<8xf32>
    %242 = vector.shape_cast %241 : vector<8xf32> to vector<8x1xf32>
    %cst_113 = arith.constant 3.200000e+01 : f32
    %243 = vector.broadcast %cst_113 : f32 to vector<8x1xf32>
    %244 = arith.divf %242, %243 : vector<8x1xf32>
    %245 = vector.broadcast %235 : vector<8x1xf32> to vector<8x32xf32>
    %246 = arith.subf %227, %245 : vector<8x32xf32>
    %cst_114 = arith.constant 9.99999974E-6 : f32
    %247 = vector.broadcast %cst_114 : f32 to vector<8x1xf32>
    %248 = arith.addf %244, %247 : vector<8x1xf32>
    %249 = math.rsqrt %248 : vector<8x1xf32>
    %250 = vector.broadcast %249 : vector<8x1xf32> to vector<8x32xf32>
    %251 = arith.mulf %246, %250 : vector<8x32xf32>
    %252 = vector.broadcast %229 : vector<1x32xf32> to vector<8x32xf32>
    %253 = arith.mulf %251, %252 : vector<8x32xf32>
    %254 = vector.broadcast %231 : vector<1x32xf32> to vector<8x32xf32>
    %255 = arith.addf %253, %254 : vector<8x32xf32>
    %c1_115 = arith.constant 1 : index
    %c0_116 = arith.constant 0 : index
    %c0_117 = arith.constant 0 : index
    %256 = vector.load %arg12[%c1_115, %c0_116, %c0_117] : memref<2x32x64xf32, #tpu.memory_space<vmem>>, vector<1x32x64xf32>
    %257 = vector.shape_cast %256 : vector<1x32x64xf32> to vector<32x64xf32>
    %cst_118 = arith.constant dense<0.000000e+00> : vector<8x64xf32>
    %258 = tpu.matmul %255, %257, %cst_118 {dimension_numbers = #tpu.dot_dimension_numbers<[1], [0], [0], [1], [0, 0, 1, 1], [], []>} : vector<8x32xf32>, vector<32x64xf32>, vector<8x64xf32> -> vector<8x64xf32>
    %c1_119 = arith.constant 1 : index
    %c0_120 = arith.constant 0 : index
    %c0_121 = arith.constant 0 : index
    %259 = vector.load %arg13[%c1_119, %c0_120, %c0_121] : memref<2x1x64xf32, #tpu.memory_space<vmem>>, vector<1x1x64xf32>
    %260 = vector.shape_cast %259 : vector<1x1x64xf32> to vector<1x64xf32>
    %261 = vector.broadcast %260 : vector<1x64xf32> to vector<8x64xf32>
    %262 = arith.addf %258, %261 : vector<8x64xf32>
    %cst_122 = arith.constant 5.000000e-01 : f32
    %263 = vector.broadcast %cst_122 : f32 to vector<8x64xf32>
    %264 = arith.mulf %263, %262 : vector<8x64xf32>
    %cst_123 = arith.constant 4.471500e-02 : f32
    %265 = vector.broadcast %cst_123 : f32 to vector<8x64xf32>
    %266 = arith.mulf %265, %262 : vector<8x64xf32>
    %267 = arith.mulf %266, %262 : vector<8x64xf32>
    %268 = arith.mulf %267, %262 : vector<8x64xf32>
    %269 = arith.addf %262, %268 : vector<8x64xf32>
    %cst_124 = arith.constant 0.797884583 : f32
    %270 = vector.broadcast %cst_124 : f32 to vector<8x64xf32>
    %271 = arith.mulf %270, %269 : vector<8x64xf32>
    %272 = math.tanh %271 : vector<8x64xf32>
    %cst_125 = arith.constant 1.000000e+00 : f32
    %273 = vector.broadcast %cst_125 : f32 to vector<8x64xf32>
    %274 = arith.addf %273, %272 : vector<8x64xf32>
    %275 = arith.mulf %264, %274 : vector<8x64xf32>
    %c1_126 = arith.constant 1 : index
    %c0_127 = arith.constant 0 : index
    %c0_128 = arith.constant 0 : index
    %276 = vector.load %arg14[%c1_126, %c0_127, %c0_128] : memref<2x64x32xf32, #tpu.memory_space<vmem>>, vector<1x64x32xf32>
    %277 = vector.shape_cast %276 : vector<1x64x32xf32> to vector<64x32xf32>
    %cst_129 = arith.constant dense<0.000000e+00> : vector<8x32xf32>
    %278 = tpu.matmul %275, %277, %cst_129 {dimension_numbers = #tpu.dot_dimension_numbers<[1], [0], [0], [1], [0, 0, 1, 1], [], []>} : vector<8x64xf32>, vector<64x32xf32>, vector<8x32xf32> -> vector<8x32xf32>
    %c1_130 = arith.constant 1 : index
    %c0_131 = arith.constant 0 : index
    %c0_132 = arith.constant 0 : index
    %279 = vector.load %arg15[%c1_130, %c0_131, %c0_132] : memref<2x1x32xf32, #tpu.memory_space<vmem>>, vector<1x1x32xf32>
    %280 = vector.shape_cast %279 : vector<1x1x32xf32> to vector<1x32xf32>
    %281 = vector.broadcast %280 : vector<1x32xf32> to vector<8x32xf32>
    %282 = arith.addf %278, %281 : vector<8x32xf32>
    %283 = arith.addf %282, %255 : vector<8x32xf32>
    %c1_133 = arith.constant 1 : index
    %c0_134 = arith.constant 0 : index
    %c0_135 = arith.constant 0 : index
    %284 = vector.load %arg16[%c1_133, %c0_134, %c0_135] : memref<2x1x32xf32, #tpu.memory_space<vmem>>, vector<1x1x32xf32>
    %285 = vector.shape_cast %284 : vector<1x1x32xf32> to vector<1x32xf32>
    %c1_136 = arith.constant 1 : index
    %c0_137 = arith.constant 0 : index
    %c0_138 = arith.constant 0 : index
    %286 = vector.load %arg17[%c1_136, %c0_137, %c0_138] : memref<2x1x32xf32, #tpu.memory_space<vmem>>, vector<1x1x32xf32>
    %287 = vector.shape_cast %286 : vector<1x1x32xf32> to vector<1x32xf32>
    %cst_139 = arith.constant dense<0.000000e+00> : vector<8xf32>
    %288 = vector.multi_reduction <add>, %283, %cst_139 [1] : vector<8x32xf32> to vector<8xf32>
    %289 = vector.shape_cast %288 : vector<8xf32> to vector<8x1xf32>
    %cst_140 = arith.constant 3.200000e+01 : f32
    %290 = vector.broadcast %cst_140 : f32 to vector<8x1xf32>
    %291 = arith.divf %289, %290 : vector<8x1xf32>
    %292 = vector.broadcast %291 : vector<8x1xf32> to vector<8x32xf32>
    %293 = arith.subf %283, %292 : vector<8x32xf32>
    %294 = vector.broadcast %291 : vector<8x1xf32> to vector<8x32xf32>
    %295 = arith.subf %283, %294 : vector<8x32xf32>
    %296 = arith.mulf %293, %295 : vector<8x32xf32>
    %cst_141 = arith.constant dense<0.000000e+00> : vector<8xf32>
    %297 = vector.multi_reduction <add>, %296, %cst_141 [1] : vector<8x32xf32> to vector<8xf32>
    %298 = vector.shape_cast %297 : vector<8xf32> to vector<8x1xf32>
    %cst_142 = arith.constant 3.200000e+01 : f32
    %299 = vector.broadcast %cst_142 : f32 to vector<8x1xf32>
    %300 = arith.divf %298, %299 : vector<8x1xf32>
    %301 = vector.broadcast %291 : vector<8x1xf32> to vector<8x32xf32>
    %302 = arith.subf %283, %301 : vector<8x32xf32>
    %cst_143 = arith.constant 9.99999974E-6 : f32
    %303 = vector.broadcast %cst_143 : f32 to vector<8x1xf32>
    %304 = arith.addf %300, %303 : vector<8x1xf32>
    %305 = math.rsqrt %304 : vector<8x1xf32>
    %306 = vector.broadcast %305 : vector<8x1xf32> to vector<8x32xf32>
    %307 = arith.mulf %302, %306 : vector<8x32xf32>
    %308 = vector.broadcast %285 : vector<1x32xf32> to vector<8x32xf32>
    %309 = arith.mulf %307, %308 : vector<8x32xf32>
    %310 = vector.broadcast %287 : vector<1x32xf32> to vector<8x32xf32>
    %311 = arith.addf %309, %310 : vector<8x32xf32>
    %c0_144 = arith.constant 0 : index
    %c0_145 = arith.constant 0 : index
    %312 = vector.load %arg18[%c0_144, %c0_145] : memref<32x32xf32, #tpu.memory_space<vmem>>, vector<32x32xf32>
    %cst_146 = arith.constant dense<0.000000e+00> : vector<8x32xf32>
    %313 = tpu.matmul %311, %312, %cst_146 {dimension_numbers = #tpu.dot_dimension_numbers<[1], [0], [0], [1], [0, 0, 1, 1], [], []>} : vector<8x32xf32>, vector<32x32xf32>, vector<8x32xf32> -> vector<8x32xf32>
    %c0_147 = arith.constant 0 : index
    %c0_148 = arith.constant 0 : index
    %314 = vector.load %arg19[%c0_147, %c0_148] : memref<1x32xf32, #tpu.memory_space<vmem>>, vector<1x32xf32>
    %315 = vector.broadcast %314 : vector<1x32xf32> to vector<8x32xf32>
    %316 = arith.addf %313, %315 : vector<8x32xf32>
    %cst_149 = arith.constant 5.000000e-01 : f32
    %317 = vector.broadcast %cst_149 : f32 to vector<8x32xf32>
    %318 = arith.mulf %317, %316 : vector<8x32xf32>
    %cst_150 = arith.constant 4.471500e-02 : f32
    %319 = vector.broadcast %cst_150 : f32 to vector<8x32xf32>
    %320 = arith.mulf %319, %316 : vector<8x32xf32>
    %321 = arith.mulf %320, %316 : vector<8x32xf32>
    %322 = arith.mulf %321, %316 : vector<8x32xf32>
    %323 = arith.addf %316, %322 : vector<8x32xf32>
    %cst_151 = arith.constant 0.797884583 : f32
    %324 = vector.broadcast %cst_151 : f32 to vector<8x32xf32>
    %325 = arith.mulf %324, %323 : vector<8x32xf32>
    %326 = math.tanh %325 : vector<8x32xf32>
    %cst_152 = arith.constant 1.000000e+00 : f32
    %327 = vector.broadcast %cst_152 : f32 to vector<8x32xf32>
    %328 = arith.addf %327, %326 : vector<8x32xf32>
    %329 = arith.mulf %318, %328 : vector<8x32xf32>
    %c0_153 = arith.constant 0 : index
    %c0_154 = arith.constant 0 : index
    %330 = vector.load %arg20[%c0_153, %c0_154] : memref<1x32xf32, #tpu.memory_space<vmem>>, vector<1x32xf32>
    %c0_155 = arith.constant 0 : index
    %c0_156 = arith.constant 0 : index
    %331 = vector.load %arg21[%c0_155, %c0_156] : memref<1x32xf32, #tpu.memory_space<vmem>>, vector<1x32xf32>
    %cst_157 = arith.constant dense<0.000000e+00> : vector<8xf32>
    %332 = vector.multi_reduction <add>, %329, %cst_157 [1] : vector<8x32xf32> to vector<8xf32>
    %333 = vector.shape_cast %332 : vector<8xf32> to vector<8x1xf32>
    %cst_158 = arith.constant 3.200000e+01 : f32
    %334 = vector.broadcast %cst_158 : f32 to vector<8x1xf32>
    %335 = arith.divf %333, %334 : vector<8x1xf32>
    %336 = vector.broadcast %335 : vector<8x1xf32> to vector<8x32xf32>
    %337 = arith.subf %329, %336 : vector<8x32xf32>
    %338 = vector.broadcast %335 : vector<8x1xf32> to vector<8x32xf32>
    %339 = arith.subf %329, %338 : vector<8x32xf32>
    %340 = arith.mulf %337, %339 : vector<8x32xf32>
    %cst_159 = arith.constant dense<0.000000e+00> : vector<8xf32>
    %341 = vector.multi_reduction <add>, %340, %cst_159 [1] : vector<8x32xf32> to vector<8xf32>
    %342 = vector.shape_cast %341 : vector<8xf32> to vector<8x1xf32>
    %cst_160 = arith.constant 3.200000e+01 : f32
    %343 = vector.broadcast %cst_160 : f32 to vector<8x1xf32>
    %344 = arith.divf %342, %343 : vector<8x1xf32>
    %345 = vector.broadcast %335 : vector<8x1xf32> to vector<8x32xf32>
    %346 = arith.subf %329, %345 : vector<8x32xf32>
    %cst_161 = arith.constant 9.99999974E-6 : f32
    %347 = vector.broadcast %cst_161 : f32 to vector<8x1xf32>
    %348 = arith.addf %344, %347 : vector<8x1xf32>
    %349 = math.rsqrt %348 : vector<8x1xf32>
    %350 = vector.broadcast %349 : vector<8x1xf32> to vector<8x32xf32>
    %351 = arith.mulf %346, %350 : vector<8x32xf32>
    %352 = vector.broadcast %330 : vector<1x32xf32> to vector<8x32xf32>
    %353 = arith.mulf %351, %352 : vector<8x32xf32>
    %354 = vector.broadcast %331 : vector<1x32xf32> to vector<8x32xf32>
    %355 = arith.addf %353, %354 : vector<8x32xf32>
    %c0_162 = arith.constant 0 : index
    %c0_163 = arith.constant 0 : index
    %356 = vector.load %arg22[%c0_162, %c0_163] : memref<32x128xf32, #tpu.memory_space<vmem>>, vector<32x128xf32>
    %cst_164 = arith.constant dense<0.000000e+00> : vector<8x128xf32>
    %357 = tpu.matmul %355, %356, %cst_164 {dimension_numbers = #tpu.dot_dimension_numbers<[1], [0], [0], [1], [0, 0, 1, 1], [], []>} : vector<8x32xf32>, vector<32x128xf32>, vector<8x128xf32> -> vector<8x128xf32>
    %c0_165 = arith.constant 0 : index
    %c0_166 = arith.constant 0 : index
    %358 = vector.load %arg23[%c0_165, %c0_166] : memref<1x128xf32, #tpu.memory_space<vmem>>, vector<1x128xf32>
    %359 = vector.broadcast %358 : vector<1x128xf32> to vector<8x128xf32>
    %360 = arith.addf %357, %359 : vector<8x128xf32>
    %c0_167 = arith.constant 0 : index
    %c0_168 = arith.constant 0 : index
    %c0_169 = arith.constant 0 : index
    %361 = vector.load %arg24[%c0_167, %c0_168, %c0_169] : memref<1x8x128xf32, #tpu.memory_space<vmem>>, vector<1x8x128xf32>
    %362 = vector.shape_cast %361 : vector<1x8x128xf32> to vector<8x128xf32>
    %363 = vector.shape_cast %360 : vector<8x128xf32> to vector<1x8x128xf32>
    tpu.vector_store %arg24[%c0_167, %c0_168, %c0_169], %363 {strides = array<i32>} : memref<1x8x128xf32, #tpu.memory_space<vmem>>, vector<1x8x128xf32>,
    %c0_170 = arith.constant 0 : index
    %c0_171 = arith.constant 0 : index
    %c0_172 = arith.constant 0 : index
    %364 = vector.load %arg3[%c0_170, %c0_171, %c0_172] : memref<1x8x1xi32, #tpu.memory_space<vmem>>, vector<1x8x1xi32>
    %365 = vector.shape_cast %364 : vector<1x8x1xi32> to vector<8x1xi32>
    %cst_173 = arith.constant dense<0xFF800000> : vector<8xf32>
    %366 = vector.multi_reduction <maximumf>, %360, %cst_173 [1] : vector<8x128xf32> to vector<8xf32>
    %367 = vector.shape_cast %366 : vector<8xf32> to vector<8x1xf32>
    %368 = vector.broadcast %367 : vector<8x1xf32> to vector<8x128xf32>
    %369 = arith.subf %360, %368 : vector<8x128xf32>
    %370 = math.exp %369 : vector<8x128xf32>
    %cst_174 = arith.constant dense<0.000000e+00> : vector<8xf32>
    %371 = vector.multi_reduction <add>, %370, %cst_174 [1] : vector<8x128xf32> to vector<8xf32>
    %372 = vector.shape_cast %371 : vector<8xf32> to vector<8x1xf32>
    %373 = math.log %372 : vector<8x1xf32>
    %374 = arith.addf %373, %367 : vector<8x1xf32>
    %375 = vector.broadcast %374 : vector<8x1xf32> to vector<8x128xf32>
    %376 = arith.subf %360, %375 : vector<8x128xf32>
    %377 = tpu.iota {dimensions = array<i32: 1>} : vector<8x128xi32>
    %378 = vector.broadcast %365 : vector<8x1xi32> to vector<8x128xi32>
    %379 = arith.cmpi eq, %377, %378 : vector<8x128xi32>
    %380 = arith.extui %379 : vector<8x128xi1> to vector<8x128xi32>
    %381 = arith.sitofp %380 : vector<8x128xi32> to vector<8x128xf32>
    %382 = arith.mulf %376, %381 : vector<8x128xf32>
    %cst_175 = arith.constant dense<0.000000e+00> : vector<8xf32>
    %383 = vector.multi_reduction <add>, %382, %cst_175 [1] : vector<8x128xf32> to vector<8xf32>
    %384 = vector.shape_cast %383 : vector<8xf32> to vector<8x1xf32>
    %cst_176 = arith.constant 0.000000e+00 : f32
    %385 = vector.broadcast %cst_176 : f32 to vector<8x1xf32>
    %386 = arith.subf %385, %384 : vector<8x1xf32>
    %c0_177 = arith.constant 0 : index
    %c0_178 = arith.constant 0 : index
    %c0_179 = arith.constant 0 : index
    %387 = vector.load %arg25[%c0_177, %c0_178, %c0_179] : memref<1x8x1xf32, #tpu.memory_space<vmem>>, vector<1x8x1xf32>
    %388 = vector.shape_cast %387 : vector<1x8x1xf32> to vector<8x1xf32>
    %389 = vector.shape_cast %386 : vector<8x1xf32> to vector<1x8x1xf32>
    tpu.vector_store %arg25[%c0_177, %c0_178, %c0_179], %389 {strides = array<i32>} : memref<1x8x1xf32, #tpu.memory_space<vmem>>, vector<1x8x1xf32>,
    return
  }
  func.func @transform_0(%arg0: i32) -> (i32, i32, i32) {
    %c0_i32 = arith.constant 0 : i32
    %c0_i32_0 = arith.constant 0 : i32
    %c0_i32_1 = arith.constant 0 : i32
    return %arg0, %c0_i32, %c0_i32_0 : i32, i32, i32
  }
  func.func @transform_1(%arg0: i32) -> (i32, i32, i32) {
    %c0_i32 = arith.constant 0 : i32
    %c0_i32_0 = arith.constant 0 : i32
    %c0_i32_1 = arith.constant 0 : i32
    return %arg0, %c0_i32, %c0_i32_0 : i32, i32, i32
  }
  func.func @transform_2(%arg0: i32) -> (i32, i32, i32) {
    %c0_i32 = arith.constant 0 : i32
    %c0_i32_0 = arith.constant 0 : i32
    %c0_i32_1 = arith.constant 0 : i32
    return %arg0, %c0_i32, %c0_i32_0 : i32, i32, i32
  }
  func.func @transform_3(%arg0: i32) -> (i32, i32) {
    %c0_i32 = arith.constant 0 : i32
    %c0_i32_0 = arith.constant 0 : i32
    %c0_i32_1 = arith.constant 0 : i32
    return %c0_i32, %c0_i32_0 : i32, i32
  }
  func.func @transform_4(%arg0: i32) -> (i32, i32) {
    %c0_i32 = arith.constant 0 : i32
    %c0_i32_0 = arith.constant 0 : i32
    %c0_i32_1 = arith.constant 0 : i32
    return %c0_i32, %c0_i32_0 : i32, i32
  }
  func.func @transform_5(%arg0: i32) -> (i32, i32, i32) {
    %c0_i32 = arith.constant 0 : i32
    %c0_i32_0 = arith.constant 0 : i32
    %c0_i32_1 = arith.constant 0 : i32
    %c0_i32_2 = arith.constant 0 : i32
    return %c0_i32, %c0_i32_0, %c0_i32_1 : i32, i32, i32
  }
  func.func @transform_6(%arg0: i32) -> (i32, i32, i32) {
    %c0_i32 = arith.constant 0 : i32
    %c0_i32_0 = arith.constant 0 : i32
    %c0_i32_1 = arith.constant 0 : i32
    %c0_i32_2 = arith.constant 0 : i32
    return %c0_i32, %c0_i32_0, %c0_i32_1 : i32, i32, i32
  }
  func.func @transform_7(%arg0: i32) -> (i32, i32, i32) {
    %c0_i32 = arith.constant 0 : i32
    %c0_i32_0 = arith.constant 0 : i32
    %c0_i32_1 = arith.constant 0 : i32
    %c0_i32_2 = arith.constant 0 : i32
    return %c0_i32, %c0_i32_0, %c0_i32_1 : i32, i32, i32
  }
  func.func @transform_8(%arg0: i32) -> (i32, i32, i32) {
    %c0_i32 = arith.constant 0 : i32
    %c0_i32_0 = arith.constant 0 : i32
    %c0_i32_1 = arith.constant 0 : i32
    %c0_i32_2 = arith.constant 0 : i32
    return %c0_i32, %c0_i32_0, %c0_i32_1 : i32, i32, i32
  }
  func.func @transform_9(%arg0: i32) -> (i32, i32, i32) {
    %c0_i32 = arith.constant 0 : i32
    %c0_i32_0 = arith.constant 0 : i32
    %c0_i32_1 = arith.constant 0 : i32
    %c0_i32_2 = arith.constant 0 : i32
    return %c0_i32, %c0_i32_0, %c0_i32_1 : i32, i32, i32
  }
  func.func @transform_10(%arg0: i32) -> (i32, i32, i32) {
    %c0_i32 = arith.constant 0 : i32
    %c0_i32_0 = arith.constant 0 : i32
    %c0_i32_1 = arith.constant 0 : i32
    %c0_i32_2 = arith.constant 0 : i32
    return %c0_i32, %c0_i32_0, %c0_i32_1 : i32, i32, i32
  }
  func.func @transform_11(%arg0: i32) -> (i32, i32, i32) {
    %c0_i32 = arith.constant 0 : i32
    %c0_i32_0 = arith.constant 0 : i32
    %c0_i32_1 = arith.constant 0 : i32
    %c0_i32_2 = arith.constant 0 : i32
    return %c0_i32, %c0_i32_0, %c0_i32_1 : i32, i32, i32
  }
  func.func @transform_12(%arg0: i32) -> (i32, i32, i32) {
    %c0_i32 = arith.constant 0 : i32
    %c0_i32_0 = arith.constant 0 : i32
    %c0_i32_1 = arith.constant 0 : i32
    %c0_i32_2 = arith.constant 0 : i32
    return %c0_i32, %c0_i32_0, %c0_i32_1 : i32, i32, i32
  }
  func.func @transform_13(%arg0: i32) -> (i32, i32, i32) {
    %c0_i32 = arith.constant 0 : i32
    %c0_i32_0 = arith.constant 0 : i32
    %c0_i32_1 = arith.constant 0 : i32
    %c0_i32_2 = arith.constant 0 : i32
    return %c0_i32, %c0_i32_0, %c0_i32_1 : i32, i32, i32
  }
  func.func @transform_14(%arg0: i32) -> (i32, i32, i32) {
    %c0_i32 = arith.constant 0 : i32
    %c0_i32_0 = arith.constant 0 : i32
    %c0_i32_1 = arith.constant 0 : i32
    %c0_i32_2 = arith.constant 0 : i32
    return %c0_i32, %c0_i32_0, %c0_i32_1 : i32, i32, i32
  }
  func.func @transform_15(%arg0: i32) -> (i32, i32, i32) {
    %c0_i32 = arith.constant 0 : i32
    %c0_i32_0 = arith.constant 0 : i32
    %c0_i32_1 = arith.constant 0 : i32
    %c0_i32_2 = arith.constant 0 : i32
    return %c0_i32, %c0_i32_0, %c0_i32_1 : i32, i32, i32
  }
  func.func @transform_16(%arg0: i32) -> (i32, i32, i32) {
    %c0_i32 = arith.constant 0 : i32
    %c0_i32_0 = arith.constant 0 : i32
    %c0_i32_1 = arith.constant 0 : i32
    %c0_i32_2 = arith.constant 0 : i32
    return %c0_i32, %c0_i32_0, %c0_i32_1 : i32, i32, i32
  }
  func.func @transform_17(%arg0: i32) -> (i32, i32) {
    %c0_i32 = arith.constant 0 : i32
    %c0_i32_0 = arith.constant 0 : i32
    %c0_i32_1 = arith.constant 0 : i32
    return %c0_i32, %c0_i32_0 : i32, i32
  }
  func.func @transform_18(%arg0: i32) -> (i32, i32) {
    %c0_i32 = arith.constant 0 : i32
    %c0_i32_0 = arith.constant 0 : i32
    %c0_i32_1 = arith.constant 0 : i32
    return %c0_i32, %c0_i32_0 : i32, i32
  }
  func.func @transform_19(%arg0: i32) -> (i32, i32) {
    %c0_i32 = arith.constant 0 : i32
    %c0_i32_0 = arith.constant 0 : i32
    %c0_i32_1 = arith.constant 0 : i32
    return %c0_i32, %c0_i32_0 : i32, i32
  }
  func.func @transform_20(%arg0: i32) -> (i32, i32) {
    %c0_i32 = arith.constant 0 : i32
    %c0_i32_0 = arith.constant 0 : i32
    %c0_i32_1 = arith.constant 0 : i32
    return %c0_i32, %c0_i32_0 : i32, i32
  }
  func.func @transform_21(%arg0: i32) -> (i32, i32) {
    %c0_i32 = arith.constant 0 : i32
    %c0_i32_0 = arith.constant 0 : i32
    %c0_i32_1 = arith.constant 0 : i32
    return %c0_i32, %c0_i32_0 : i32, i32
  }
  func.func @transform_22(%arg0: i32) -> (i32, i32) {
    %c0_i32 = arith.constant 0 : i32
    %c0_i32_0 = arith.constant 0 : i32
    %c0_i32_1 = arith.constant 0 : i32
    return %c0_i32, %c0_i32_0 : i32, i32
  }
  func.func @transform_23(%arg0: i32) -> (i32, i32, i32) {
    %c0_i32 = arith.constant 0 : i32
    %c0_i32_0 = arith.constant 0 : i32
    %c0_i32_1 = arith.constant 0 : i32
    return %arg0, %c0_i32, %c0_i32_0 : i32, i32, i32
  }
  func.func @transform_24(%arg0: i32) -> (i32, i32, i32) {
    %c0_i32 = arith.constant 0 : i32
    %c0_i32_0 = arith.constant 0 : i32
    %c0_i32_1 = arith.constant 0 : i32
    return %arg0, %c0_i32, %c0_i32_0 : i32, i32, i32
  }
}

</mosaic_0001>

<llo_original>
// kernel: inversion_plm_forward.1
$region0: #{inversion_plm_forward.1}
  #allocation0 [shape = 'u32[]', space=smem, size = 0x4, offset = 0x4, fixed_abs, tag = 'smem constant byte address 0x4 - core index']
  #allocation1 [shape = 'u32[72,128]{1,0:T(1,128)}', space=vmem, size = 0x9000, scoped, tag = 'internal scratch']
  %s0 = inlined_call_operand.vmem [shape: f32[2,8,32], index: 0, kind: input, shape index: {}]
  %s1 = inlined_call_operand.vmem [shape: f32[2,1,8], index: 1, kind: input, shape index: {}]
  %s2 = inlined_call_operand.vmem [shape: s32[2,8,1], index: 2, kind: input, shape index: {}]
  %s3 = inlined_call_operand.hbm [shape: f32[1,32], index: 3, kind: input, shape index: {}]
  %s4 = inlined_call_operand.hbm [shape: f32[1,32], index: 4, kind: input, shape index: {}]
  %s5 = inlined_call_operand.vmem [shape: f32[2,32,96], index: 5, kind: input, shape index: {}]
  %s6 = inlined_call_operand.hbm [shape: f32[2,1,96], index: 6, kind: input, shape index: {}]
  %s7 = inlined_call_operand.vmem [shape: f32[2,32,32], index: 7, kind: input, shape index: {}]
  %s8 = inlined_call_operand.hbm [shape: f32[2,1,32], index: 8, kind: input, shape index: {}]
  %s9 = inlined_call_operand.hbm [shape: f32[2,1,32], index: 9, kind: input, shape index: {}]
  %s10 = inlined_call_operand.hbm [shape: f32[2,1,32], index: 10, kind: input, shape index: {}]
  %s11 = inlined_call_operand.vmem [shape: f32[2,32,64], index: 11, kind: input, shape index: {}]
  %s12 = inlined_call_operand.hbm [shape: f32[2,1,64], index: 12, kind: input, shape index: {}]
  %s13 = inlined_call_operand.vmem [shape: f32[2,64,32], index: 13, kind: input, shape index: {}]
  %s14 = inlined_call_operand.hbm [shape: f32[2,1,32], index: 14, kind: input, shape index: {}]
  %s15 = inlined_call_operand.hbm [shape: f32[2,1,32], index: 15, kind: input, shape index: {}]
  %s16 = inlined_call_operand.hbm [shape: f32[2,1,32], index: 16, kind: input, shape index: {}]
  %s17 = inlined_call_operand.vmem [shape: f32[32,32], index: 17, kind: input, shape index: {}]
  %s18 = inlined_call_operand.hbm [shape: f32[1,32], index: 18, kind: input, shape index: {}]
  %s19 = inlined_call_operand.hbm [shape: f32[1,32], index: 19, kind: input, shape index: {}]
  %s20 = inlined_call_operand.hbm [shape: f32[1,32], index: 20, kind: input, shape index: {}]
  %s21 = inlined_call_operand.vmem [shape: f32[32,128], index: 21, kind: input, shape index: {}]
  %s22 = inlined_call_operand.hbm [shape: f32[1,128], index: 22, kind: input, shape index: {}]
  %s23 = inlined_call_operand.hbm [shape: f32[2,8,128], index: 23, kind: output, shape index: {0}]
  %s24 = inlined_call_operand.vmem [shape: f32[2,8,1], index: 24, kind: output, shape index: {1}]
  %25 = xla_tuple %s23, %s24
  %s26 = sld [smem:[#allocation0]]
  $region189: #{inversion_plm_forward.1} parent=0
    _
  %s28 = ssub.s32 1, %s26
  %s29 = scalar_select 0, %s28, %s26
  $region1: #{inversion_plm_forward.1} parent=0
    #allocation2 [shape = 'u8[512]{0}', space=vmem, size = 0x400, scoped, tag = 'input window, operand 3, single buffered']
    #allocation3 [shape = 's32[2]{0}', space=sflag, size = 0x8, scoped, tag = 'scoped memory for inversion_plm_forward.1']
    #allocation4 [shape = 's32[2]{0}', space=sflag, size = 0x8, scoped, tag = 'scoped memory for inversion_plm_forward.1']
    #allocation5 [shape = 'u8[512]{0}', space=vmem, size = 0x400, scoped, tag = 'input window, operand 4, single buffered']
    #allocation6 [shape = 's32[1]{0}', space=sflag, size = 0x4, scoped, tag = 'scoped memory for inversion_plm_forward.1']
    #allocation7 [shape = 'u8[1024]{0}', space=vmem, size = 0x400, scoped, tag = 'input window, operand 6, single buffered']
    #allocation8 [shape = 'u8[1024]{0}', space=vmem, size = 0x400, scoped, tag = 'input window, operand 8, single buffered']
    #allocation9 [shape = 's32[1]{0}', space=sflag, size = 0x4, scoped, tag = 'scoped memory for inversion_plm_forward.1']
    #allocation10 [shape = 'u8[1024]{0}', space=vmem, size = 0x400, scoped, tag = 'input window, operand 9, single buffered']
    #allocation11 [shape = 'u8[1024]{0}', space=vmem, size = 0x400, scoped, tag = 'input window, operand 10, single buffered']
    #allocation12 [shape = 's32[1]{0}', space=sflag, size = 0x4, scoped, tag = 'scoped memory for inversion_plm_forward.1']
    #allocation13 [shape = 'u8[1024]{0}', space=vmem, size = 0x400, scoped, tag = 'input window, operand 12, single buffered']
    #allocation14 [shape = 'u8[1024]{0}', space=vmem, size = 0x400, scoped, tag = 'input window, operand 14, single buffered']
    #allocation15 [shape = 's32[1]{0}', space=sflag, size = 0x4, scoped, tag = 'scoped memory for inversion_plm_forward.1']
    #allocation16 [shape = 'u8[1024]{0}', space=vmem, size = 0x400, scoped, tag = 'input window, operand 15, single buffered']
    #allocation17 [shape = 'u8[1024]{0}', space=vmem, size = 0x400, scoped, tag = 'input window, operand 16, single buffered']
    #allocation18 [shape = 's32[1]{0}', space=sflag, size = 0x4, scoped, tag = 'scoped memory for inversion_plm_forward.1']
    #allocation19 [shape = 'u8[512]{0}', space=vmem, size = 0x400, scoped, tag = 'input window, operand 18, single buffered']
    #allocation20 [shape = 'u8[512]{0}', space=vmem, size = 0x400, scoped, tag = 'input window, operand 19, single buffered']
    #allocation21 [shape = 's32[1]{0}', space=sflag, size = 0x4, scoped, tag = 'scoped memory for inversion_plm_forward.1']
    #allocation22 [shape = 'u8[512]{0}', space=vmem, size = 0x400, scoped, tag = 'input window, operand 20, single buffered']
    #allocation23 [shape = 'u8[512]{0}', space=vmem, size = 0x400, scoped, tag = 'input window, operand 22, single buffered']
    #allocation24 [shape = 's32[1]{0}', space=sflag, size = 0x4, scoped, tag = 'scoped memory for inversion_plm_forward.1']
    #allocation25 [shape = 'u8[8192]{0}', space=vmem, size = 0x2000, scoped, tag = 'output window, operand 0']
    %30 = vsyncpa [#allocation3], 0
    %31 = vsyncpa [#allocation6], 0
    %32 = vsyncpa [#allocation9], 0
    %33 = vsyncpa [#allocation12], 0
    %34 = vsyncpa [#allocation15], 0
    %35 = vsyncpa [#allocation18], 0
    %36 = vsyncpa [#allocation21], 0
    %37 = vsyncpa [#allocation24], 0
    %38 = vsyncpa [#allocation4], 0
    %s39 = scalar_lea.sflag [#allocation4], 1
    %40 = vsyncpa %s39, 0
    loop: start=0, step=1, limit=4
    $region2: #{inversion_plm_forward.1} parent=1 // loop_pre_header
      _
    $region3: #{inversion_plm_forward.1} parent=1 // loop_header
      %s42 = sphi 0, %s46
      %p43 = scmp.ge.s32.totalorder %s42, 4
      %s52 = sphi 0, %s54
      %s55 = sphi 0, %s52
      %s56 = sphi 0, %s55
      %s72 = sphi 0, %s56
      %s78 = sphi 0, %s80
      %s81 = sphi 0, %s78
      %s82 = sphi 0, %s81
      %s98 = sphi 0, %s82
      %s104 = sphi 0, %s106
      %s107 = sphi 0, %s104
      %s108 = sphi 0, %s107
      %s124 = sphi 0, %s108
      %s128 = sphi 0, %s128
      %s130 = sphi 0, %s128
      %s131 = sphi 0, %s130
      %s145 = sphi 0, %s131
      %s149 = sphi 0, %s149
      %s151 = sphi 0, %s149
      %s152 = sphi 0, %s151
      %s166 = sphi 0, %s152
      %s170 = sphi 0, %s170
      %s172 = sphi 0, %s170
      %s173 = sphi 0, %s172
      %s187 = sphi 0, %s173
      %s191 = sphi 0, %s191
      %s193 = sphi 0, %s191
      %s194 = sphi 0, %s193
      %s208 = sphi 0, %s194
      %s212 = sphi 0, %s212
      %s214 = sphi 0, %s212
      %s215 = sphi 0, %s214
      %s229 = sphi 0, %s215
      %s233 = sphi 0, %s233
      %s235 = sphi 0, %s233
      %s236 = sphi 0, %s235
      %s250 = sphi 0, %s236
      %s254 = sphi 0, %s254
      %s256 = sphi 0, %s254
      %s257 = sphi 0, %s256
      %s271 = sphi 0, %s257
      %s275 = sphi 0, %s275
      %s277 = sphi 0, %s275
      %s278 = sphi 0, %s277
      %s292 = sphi 0, %s278
      %s296 = sphi 0, %s296
      %s298 = sphi 0, %s296
      %s299 = sphi 0, %s298
      %s313 = sphi 0, %s299
      %s317 = sphi 0, %s317
      %s319 = sphi 0, %s317
      %s320 = sphi 0, %s319
      %s334 = sphi 0, %s320
      %s338 = sphi 0, %s338
      %s340 = sphi 0, %s338
      %s341 = sphi 0, %s340
      %s355 = sphi 0, %s341
      %s359 = sphi 0, %s359
      %s361 = sphi 0, %s359
      %s362 = sphi 0, %s361
      %s376 = sphi 0, %s362
      %s380 = sphi 0, %s380
      %s382 = sphi 0, %s380
      %s383 = sphi 0, %s382
      %s397 = sphi 0, %s383
      %s401 = sphi 0, %s401
      %s403 = sphi 0, %s401
      %s404 = sphi 0, %s403
      %s418 = sphi 0, %s404
      %s422 = sphi 0, %s422
      %s424 = sphi 0, %s422
      %s425 = sphi 0, %s424
      %s439 = sphi 0, %s425
      %s443 = sphi 0, %s443
      %s445 = sphi 0, %s443
      %s446 = sphi 0, %s445
      %s460 = sphi 0, %s446
      %s464 = sphi 0, %s464
      %s466 = sphi 0, %s464
      %s467 = sphi 0, %s466
      %s481 = sphi 0, %s467
      %s485 = sphi 0, %s485
      %s487 = sphi 0, %s485
      %s488 = sphi 0, %s487
      %s502 = sphi 0, %s488
      %s506 = sphi 0, %s506
      %s508 = sphi 0, %s506
      %s509 = sphi 0, %s508
      %s523 = sphi 0, %s509
      %s527 = sphi 0, %s527
      %s529 = sphi 0, %s527
      %s530 = sphi 0, %s529
      %s544 = sphi 0, %s530
      %s550 = sphi 0, %s552
      %s553 = sphi 0, %s550
      %s554 = sphi 0, %s553
      %s570 = sphi 0, %s554
      %s576 = sphi 0, %s578
      %s579 = sphi 0, %s576
      %s580 = sphi 0, %s579
      %s596 = sphi 0, %s580
    $region4: #{inversion_plm_forward.1} parent=1 // loop_header_branch
      %45 = sbr.rel (%p43) target = $region8
    $region5: #{inversion_plm_forward.1} parent=1 // loop_body
      %s47 = ssub.s32 %s42, 1
      %s48 = ssub.s32 %s42, 2
      %s49 = sadd.s32 %s42, 1
      %s50 = ssub.s32 %s42, %s49
      %p51 = scmp.eq.s32.totalorder %s50, 0
      %s53 = sadd.s32 %s52, 1
      %s54 = scalar_select %p51, %s52, %s53
      %p57 = pneg %p51
      %p58 = scmp.eq.s32.totalorder %s42, 1
      %p59 = por %p57, %p58
      %p60 = scmp.ne.s32.totalorder %s52, %s55
      %p61 = scmp.eq.s32.totalorder %s42, 0
      %p62 = por %p60, %p61
      %p63 = scmp.ne.s32.totalorder %s52, %s55
      %p64 = scmp.eq.s32.totalorder %s47, 1
      %p65 = por %p63, %p64
      %p66 = scmp.ne.s32.totalorder %s55, %s56
      %p67 = scmp.eq.s32.totalorder %s47, 0
      %p68 = por %p66, %p67
      %p69 = scmp.ne.s32.totalorder %s55, %s56
      %p70 = scmp.eq.s32.totalorder %s48, 1
      %p71 = por %p69, %p70
      %p73 = scmp.ne.s32.totalorder %s56, %s72
      %p74 = scmp.eq.s32.totalorder %s48, 0
      %p75 = por %p73, %p74
      %s76 = ssub.s32 %s42, %s49
      %p77 = scmp.eq.s32.totalorder %s76, 0
      %s79 = sadd.s32 %s78, 1
      %s80 = scalar_select %p77, %s78, %s79
      %p83 = pneg %p77
      %p84 = scmp.eq.s32.totalorder %s42, 1
      %p85 = por %p83, %p84
      %p86 = scmp.ne.s32.totalorder %s78, %s81
      %p87 = scmp.eq.s32.totalorder %s42, 0
      %p88 = por %p86, %p87
      %p89 = scmp.ne.s32.totalorder %s78, %s81
      %p90 = scmp.eq.s32.totalorder %s47, 1
      %p91 = por %p89, %p90
      %p92 = scmp.ne.s32.totalorder %s81, %s82
      %p93 = scmp.eq.s32.totalorder %s47, 0
      %p94 = por %p92, %p93
      %p95 = scmp.ne.s32.totalorder %s81, %s82
      %p96 = scmp.eq.s32.totalorder %s48, 1
      %p97 = por %p95, %p96
      %p99 = scmp.ne.s32.totalorder %s82, %s98
      %p100 = scmp.eq.s32.totalorder %s48, 0
      %p101 = por %p99, %p100
      %s102 = ssub.s32 %s42, %s49
      %p103 = scmp.eq.s32.totalorder %s102, 0
      %s105 = sadd.s32 %s104, 1
      %s106 = scalar_select %p103, %s104, %s105
      %p109 = pneg %p103
      %p110 = scmp.eq.s32.totalorder %s42, 1
      %p111 = por %p109, %p110
      %p112 = scmp.ne.s32.totalorder %s104, %s107
      %p113 = scmp.eq.s32.totalorder %s42, 0
      %p114 = por %p112, %p113
      %p115 = scmp.ne.s32.totalorder %s104, %s107
      %p116 = scmp.eq.s32.totalorder %s47, 1
      %p117 = por %p115, %p116
      %p118 = scmp.ne.s32.totalorder %s107, %s108
      %p119 = scmp.eq.s32.totalorder %s47, 0
      %p120 = por %p118, %p119
      %p121 = scmp.ne.s32.totalorder %s107, %s108
      %p122 = scmp.eq.s32.totalorder %s48, 1
      %p123 = por %p121, %p122
      %p125 = scmp.ne.s32.totalorder %s108, %s124
      %p126 = scmp.eq.s32.totalorder %s48, 0
      %p127 = por %p125, %p126
      %s129 = sadd.s32 %s128, 1
      %p132 = scmp.eq.s32.totalorder %s42, 1
      %p133 = scmp.ne.s32.totalorder %s128, %s130
      %p134 = scmp.eq.s32.totalorder %s42, 0
      %p135 = por %p133, %p134
      %p136 = scmp.ne.s32.totalorder %s128, %s130
      %p137 = scmp.eq.s32.totalorder %s47, 1
      %p138 = por %p136, %p137
      %p139 = scmp.ne.s32.totalorder %s130, %s131
      %p140 = scmp.eq.s32.totalorder %s47, 0
      %p141 = por %p139, %p140
      %p142 = scmp.ne.s32.totalorder %s130, %s131
      %p143 = scmp.eq.s32.totalorder %s48, 1
      %p144 = por %p142, %p143
      %p146 = scmp.ne.s32.totalorder %s131, %s145
      %p147 = scmp.eq.s32.totalorder %s48, 0
      %p148 = por %p146, %p147
      %s150 = sadd.s32 %s149, 1
      %p153 = scmp.eq.s32.totalorder %s42, 1
      %p154 = scmp.ne.s32.totalorder %s149, %s151
      %p155 = scmp.eq.s32.totalorder %s42, 0
      %p156 = por %p154, %p155
      %p157 = scmp.ne.s32.totalorder %s149, %s151
      %p158 = scmp.eq.s32.totalorder %s47, 1
      %p159 = por %p157, %p158
      %p160 = scmp.ne.s32.totalorder %s151, %s152
      %p161 = scmp.eq.s32.totalorder %s47, 0
      %p162 = por %p160, %p161
      %p163 = scmp.ne.s32.totalorder %s151, %s152
      %p164 = scmp.eq.s32.totalorder %s48, 1
      %p165 = por %p163, %p164
      %p167 = scmp.ne.s32.totalorder %s152, %s166
      %p168 = scmp.eq.s32.totalorder %s48, 0
      %p169 = por %p167, %p168
      %s171 = sadd.s32 %s170, 1
      %p174 = scmp.eq.s32.totalorder %s42, 1
      %p175 = scmp.ne.s32.totalorder %s170, %s172
      %p176 = scmp.eq.s32.totalorder %s42, 0
      %p177 = por %p175, %p176
      %p178 = scmp.ne.s32.totalorder %s170, %s172
      %p179 = scmp.eq.s32.totalorder %s47, 1
      %p180 = por %p178, %p179
      %p181 = scmp.ne.s32.totalorder %s172, %s173
      %p182 = scmp.eq.s32.totalorder %s47, 0
      %p183 = por %p181, %p182
      %p184 = scmp.ne.s32.totalorder %s172, %s173
      %p185 = scmp.eq.s32.totalorder %s48, 1
      %p186 = por %p184, %p185
      %p188 = scmp.ne.s32.totalorder %s173, %s187
      %p189 = scmp.eq.s32.totalorder %s48, 0
      %p190 = por %p188, %p189
      %s192 = sadd.s32 %s191, 1
      %p195 = scmp.eq.s32.totalorder %s42, 1
      %p196 = scmp.ne.s32.totalorder %s191, %s193
      %p197 = scmp.eq.s32.totalorder %s42, 0
      %p198 = por %p196, %p197
      %p199 = scmp.ne.s32.totalorder %s191, %s193
      %p200 = scmp.eq.s32.totalorder %s47, 1
      %p201 = por %p199, %p200
      %p202 = scmp.ne.s32.totalorder %s193, %s194
      %p203 = scmp.eq.s32.totalorder %s47, 0
      %p204 = por %p202, %p203
      %p205 = scmp.ne.s32.totalorder %s193, %s194
      %p206 = scmp.eq.s32.totalorder %s48, 1
      %p207 = por %p205, %p206
      %p209 = scmp.ne.s32.totalorder %s194, %s208
      %p210 = scmp.eq.s32.totalorder %s48, 0
      %p211 = por %p209, %p210
      %s213 = sadd.s32 %s212, 1
      %p216 = scmp.eq.s32.totalorder %s42, 1
      %p217 = scmp.ne.s32.totalorder %s212, %s214
      %p218 = scmp.eq.s32.totalorder %s42, 0
      %p219 = por %p217, %p218
      %p220 = scmp.ne.s32.totalorder %s212, %s214
      %p221 = scmp.eq.s32.totalorder %s47, 1
      %p222 = por %p220, %p221
      %p223 = scmp.ne.s32.totalorder %s214, %s215
      %p224 = scmp.eq.s32.totalorder %s47, 0
      %p225 = por %p223, %p224
      %p226 = scmp.ne.s32.totalorder %s214, %s215
      %p227 = scmp.eq.s32.totalorder %s48, 1
      %p228 = por %p226, %p227
      %p230 = scmp.ne.s32.totalorder %s215, %s229
      %p231 = scmp.eq.s32.totalorder %s48, 0
      %p232 = por %p230, %p231
      %s234 = sadd.s32 %s233, 1
      %p237 = scmp.eq.s32.totalorder %s42, 1
      %p238 = scmp.ne.s32.totalorder %s233, %s235
      %p239 = scmp.eq.s32.totalorder %s42, 0
      %p240 = por %p238, %p239
      %p241 = scmp.ne.s32.totalorder %s233, %s235
      %p242 = scmp.eq.s32.totalorder %s47, 1
      %p243 = por %p241, %p242
      %p244 = scmp.ne.s32.totalorder %s235, %s236
      %p245 = scmp.eq.s32.totalorder %s47, 0
      %p246 = por %p244, %p245
      %p247 = scmp.ne.s32.totalorder %s235, %s236
      %p248 = scmp.eq.s32.totalorder %s48, 1
      %p249 = por %p247, %p248
      %p251 = scmp.ne.s32.totalorder %s236, %s250
      %p252 = scmp.eq.s32.totalorder %s48, 0
      %p253 = por %p251, %p252
      %s255 = sadd.s32 %s254, 1
      %p258 = scmp.eq.s32.totalorder %s42, 1
      %p259 = scmp.ne.s32.totalorder %s254, %s256
      %p260 = scmp.eq.s32.totalorder %s42, 0
      %p261 = por %p259, %p260
      %p262 = scmp.ne.s32.totalorder %s254, %s256
      %p263 = scmp.eq.s32.totalorder %s47, 1
      %p264 = por %p262, %p263
      %p265 = scmp.ne.s32.totalorder %s256, %s257
      %p266 = scmp.eq.s32.totalorder %s47, 0
      %p267 = por %p265, %p266
      %p268 = scmp.ne.s32.totalorder %s256, %s257
      %p269 = scmp.eq.s32.totalorder %s48, 1
      %p270 = por %p268, %p269
      %p272 = scmp.ne.s32.totalorder %s257, %s271
      %p273 = scmp.eq.s32.totalorder %s48, 0
      %p274 = por %p272, %p273
      %s276 = sadd.s32 %s275, 1
      %p279 = scmp.eq.s32.totalorder %s42, 1
      %p280 = scmp.ne.s32.totalorder %s275, %s277
      %p281 = scmp.eq.s32.totalorder %s42, 0
      %p282 = por %p280, %p281
      %p283 = scmp.ne.s32.totalorder %s275, %s277
      %p284 = scmp.eq.s32.totalorder %s47, 1
      %p285 = por %p283, %p284
      %p286 = scmp.ne.s32.totalorder %s277, %s278
      %p287 = scmp.eq.s32.totalorder %s47, 0
      %p288 = por %p286, %p287
      %p289 = scmp.ne.s32.totalorder %s277, %s278
      %p290 = scmp.eq.s32.totalorder %s48, 1
      %p291 = por %p289, %p290
      %p293 = scmp.ne.s32.totalorder %s278, %s292
      %p294 = scmp.eq.s32.totalorder %s48, 0
      %p295 = por %p293, %p294
      %s297 = sadd.s32 %s296, 1
      %p300 = scmp.eq.s32.totalorder %s42, 1
      %p301 = scmp.ne.s32.totalorder %s296, %s298
      %p302 = scmp.eq.s32.totalorder %s42, 0
      %p303 = por %p301, %p302
      %p304 = scmp.ne.s32.totalorder %s296, %s298
      %p305 = scmp.eq.s32.totalorder %s47, 1
      %p306 = por %p304, %p305
      %p307 = scmp.ne.s32.totalorder %s298, %s299
      %p308 = scmp.eq.s32.totalorder %s47, 0
      %p309 = por %p307, %p308
      %p310 = scmp.ne.s32.totalorder %s298, %s299
      %p311 = scmp.eq.s32.totalorder %s48, 1
      %p312 = por %p310, %p311
      %p314 = scmp.ne.s32.totalorder %s299, %s313
      %p315 = scmp.eq.s32.totalorder %s48, 0
      %p316 = por %p314, %p315
      %s318 = sadd.s32 %s317, 1
      %p321 = scmp.eq.s32.totalorder %s42, 1
      %p322 = scmp.ne.s32.totalorder %s317, %s319
      %p323 = scmp.eq.s32.totalorder %s42, 0
      %p324 = por %p322, %p323
      %p325 = scmp.ne.s32.totalorder %s317, %s319
      %p326 = scmp.eq.s32.totalorder %s47, 1
      %p327 = por %p325, %p326
      %p328 = scmp.ne.s32.totalorder %s319, %s320
      %p329 = scmp.eq.s32.totalorder %s47, 0
      %p330 = por %p328, %p329
      %p331 = scmp.ne.s32.totalorder %s319, %s320
      %p332 = scmp.eq.s32.totalorder %s48, 1
      %p333 = por %p331, %p332
      %p335 = scmp.ne.s32.totalorder %s320, %s334
      %p336 = scmp.eq.s32.totalorder %s48, 0
      %p337 = por %p335, %p336
      %s339 = sadd.s32 %s338, 1
      %p342 = scmp.eq.s32.totalorder %s42, 1
      %p343 = scmp.ne.s32.totalorder %s338, %s340
      %p344 = scmp.eq.s32.totalorder %s42, 0
      %p345 = por %p343, %p344
      %p346 = scmp.ne.s32.totalorder %s338, %s340
      %p347 = scmp.eq.s32.totalorder %s47, 1
      %p348 = por %p346, %p347
      %p349 = scmp.ne.s32.totalorder %s340, %s341
      %p350 = scmp.eq.s32.totalorder %s47, 0
      %p351 = por %p349, %p350
      %p352 = scmp.ne.s32.totalorder %s340, %s341
      %p353 = scmp.eq.s32.totalorder %s48, 1
      %p354 = por %p352, %p353
      %p356 = scmp.ne.s32.totalorder %s341, %s355
      %p357 = scmp.eq.s32.totalorder %s48, 0
      %p358 = por %p356, %p357
      %s360 = sadd.s32 %s359, 1
      %p363 = scmp.eq.s32.totalorder %s42, 1
      %p364 = scmp.ne.s32.totalorder %s359, %s361
      %p365 = scmp.eq.s32.totalorder %s42, 0
      %p366 = por %p364, %p365
      %p367 = scmp.ne.s32.totalorder %s359, %s361
      %p368 = scmp.eq.s32.totalorder %s47, 1
      %p369 = por %p367, %p368
      %p370 = scmp.ne.s32.totalorder %s361, %s362
      %p371 = scmp.eq.s32.totalorder %s47, 0
      %p372 = por %p370, %p371
      %p373 = scmp.ne.s32.totalorder %s361, %s362
      %p374 = scmp.eq.s32.totalorder %s48, 1
      %p375 = por %p373, %p374
      %p377 = scmp.ne.s32.totalorder %s362, %s376
      %p378 = scmp.eq.s32.totalorder %s48, 0
      %p379 = por %p377, %p378
      %s381 = sadd.s32 %s380, 1
      %p384 = scmp.eq.s32.totalorder %s42, 1
      %p385 = scmp.ne.s32.totalorder %s380, %s382
      %p386 = scmp.eq.s32.totalorder %s42, 0
      %p387 = por %p385, %p386
      %p388 = scmp.ne.s32.totalorder %s380, %s382
      %p389 = scmp.eq.s32.totalorder %s47, 1
      %p390 = por %p388, %p389
      %p391 = scmp.ne.s32.totalorder %s382, %s383
      %p392 = scmp.eq.s32.totalorder %s47, 0
      %p393 = por %p391, %p392
      %p394 = scmp.ne.s32.totalorder %s382, %s383
      %p395 = scmp.eq.s32.totalorder %s48, 1
      %p396 = por %p394, %p395
      %p398 = scmp.ne.s32.totalorder %s383, %s397
      %p399 = scmp.eq.s32.totalorder %s48, 0
      %p400 = por %p398, %p399
      %s402 = sadd.s32 %s401, 1
      %p405 = scmp.eq.s32.totalorder %s42, 1
      %p406 = scmp.ne.s32.totalorder %s401, %s403
      %p407 = scmp.eq.s32.totalorder %s42, 0
      %p408 = por %p406, %p407
      %p409 = scmp.ne.s32.totalorder %s401, %s403
      %p410 = scmp.eq.s32.totalorder %s47, 1
      %p411 = por %p409, %p410
      %p412 = scmp.ne.s32.totalorder %s403, %s404
      %p413 = scmp.eq.s32.totalorder %s47, 0
      %p414 = por %p412, %p413
      %p415 = scmp.ne.s32.totalorder %s403, %s404
      %p416 = scmp.eq.s32.totalorder %s48, 1
      %p417 = por %p415, %p416
      %p419 = scmp.ne.s32.totalorder %s404, %s418
      %p420 = scmp.eq.s32.totalorder %s48, 0
      %p421 = por %p419, %p420
      %s423 = sadd.s32 %s422, 1
      %p426 = scmp.eq.s32.totalorder %s42, 1
      %p427 = scmp.ne.s32.totalorder %s422, %s424
      %p428 = scmp.eq.s32.totalorder %s42, 0
      %p429 = por %p427, %p428
      %p430 = scmp.ne.s32.totalorder %s422, %s424
      %p431 = scmp.eq.s32.totalorder %s47, 1
      %p432 = por %p430, %p431
      %p433 = scmp.ne.s32.totalorder %s424, %s425
      %p434 = scmp.eq.s32.totalorder %s47, 0
      %p435 = por %p433, %p434
      %p436 = scmp.ne.s32.totalorder %s424, %s425
      %p437 = scmp.eq.s32.totalorder %s48, 1
      %p438 = por %p436, %p437
      %p440 = scmp.ne.s32.totalorder %s425, %s439
      %p441 = scmp.eq.s32.totalorder %s48, 0
      %p442 = por %p440, %p441
      %s444 = sadd.s32 %s443, 1
      %p447 = scmp.eq.s32.totalorder %s42, 1
      %p448 = scmp.ne.s32.totalorder %s443, %s445
      %p449 = scmp.eq.s32.totalorder %s42, 0
      %p450 = por %p448, %p449
      %p451 = scmp.ne.s32.totalorder %s443, %s445
      %p452 = scmp.eq.s32.totalorder %s47, 1
      %p453 = por %p451, %p452
      %p454 = scmp.ne.s32.totalorder %s445, %s446
      %p455 = scmp.eq.s32.totalorder %s47, 0
      %p456 = por %p454, %p455
      %p457 = scmp.ne.s32.totalorder %s445, %s446
      %p458 = scmp.eq.s32.totalorder %s48, 1
      %p459 = por %p457, %p458
      %p461 = scmp.ne.s32.totalorder %s446, %s460
      %p462 = scmp.eq.s32.totalorder %s48, 0
      %p463 = por %p461, %p462
      %s465 = sadd.s32 %s464, 1
      %p468 = scmp.eq.s32.totalorder %s42, 1
      %p469 = scmp.ne.s32.totalorder %s464, %s466
      %p470 = scmp.eq.s32.totalorder %s42, 0
      %p471 = por %p469, %p470
      %p472 = scmp.ne.s32.totalorder %s464, %s466
      %p473 = scmp.eq.s32.totalorder %s47, 1
      %p474 = por %p472, %p473
      %p475 = scmp.ne.s32.totalorder %s466, %s467
      %p476 = scmp.eq.s32.totalorder %s47, 0
      %p477 = por %p475, %p476
      %p478 = scmp.ne.s32.totalorder %s466, %s467
      %p479 = scmp.eq.s32.totalorder %s48, 1
      %p480 = por %p478, %p479
      %p482 = scmp.ne.s32.totalorder %s467, %s481
      %p483 = scmp.eq.s32.totalorder %s48, 0
      %p484 = por %p482, %p483
      %s486 = sadd.s32 %s485, 1
      %p489 = scmp.eq.s32.totalorder %s42, 1
      %p490 = scmp.ne.s32.totalorder %s485, %s487
      %p491 = scmp.eq.s32.totalorder %s42, 0
      %p492 = por %p490, %p491
      %p493 = scmp.ne.s32.totalorder %s485, %s487
      %p494 = scmp.eq.s32.totalorder %s47, 1
      %p495 = por %p493, %p494
      %p496 = scmp.ne.s32.totalorder %s487, %s488
      %p497 = scmp.eq.s32.totalorder %s47, 0
      %p498 = por %p496, %p497
      %p499 = scmp.ne.s32.totalorder %s487, %s488
      %p500 = scmp.eq.s32.totalorder %s48, 1
      %p501 = por %p499, %p500
      %p503 = scmp.ne.s32.totalorder %s488, %s502
      %p504 = scmp.eq.s32.totalorder %s48, 0
      %p505 = por %p503, %p504
      %s507 = sadd.s32 %s506, 1
      %p510 = scmp.eq.s32.totalorder %s42, 1
      %p511 = scmp.ne.s32.totalorder %s506, %s508
      %p512 = scmp.eq.s32.totalorder %s42, 0
      %p513 = por %p511, %p512
      %p514 = scmp.ne.s32.totalorder %s506, %s508
      %p515 = scmp.eq.s32.totalorder %s47, 1
      %p516 = por %p514, %p515
      %p517 = scmp.ne.s32.totalorder %s508, %s509
      %p518 = scmp.eq.s32.totalorder %s47, 0
      %p519 = por %p517, %p518
      %p520 = scmp.ne.s32.totalorder %s508, %s509
      %p521 = scmp.eq.s32.totalorder %s48, 1
      %p522 = por %p520, %p521
      %p524 = scmp.ne.s32.totalorder %s509, %s523
      %p525 = scmp.eq.s32.totalorder %s48, 0
      %p526 = por %p524, %p525
      %s528 = sadd.s32 %s527, 1
      %p531 = scmp.eq.s32.totalorder %s42, 1
      %p532 = scmp.ne.s32.totalorder %s527, %s529
      %p533 = scmp.eq.s32.totalorder %s42, 0
      %p534 = por %p532, %p533
      %p535 = scmp.ne.s32.totalorder %s527, %s529
      %p536 = scmp.eq.s32.totalorder %s47, 1
      %p537 = por %p535, %p536
      %p538 = scmp.ne.s32.totalorder %s529, %s530
      %p539 = scmp.eq.s32.totalorder %s47, 0
      %p540 = por %p538, %p539
      %p541 = scmp.ne.s32.totalorder %s529, %s530
      %p542 = scmp.eq.s32.totalorder %s48, 1
      %p543 = por %p541, %p542
      %p545 = scmp.ne.s32.totalorder %s530, %s544
      %p546 = scmp.eq.s32.totalorder %s48, 0
      %p547 = por %p545, %p546
      %s548 = ssub.s32 %s42, %s49
      %p549 = scmp.eq.s32.totalorder %s548, 0
      %s551 = sadd.s32 %s550, 1
      %s552 = scalar_select %p549, %s550, %s551
      %p555 = pneg %p549
      %p556 = scmp.eq.s32.totalorder %s42, 1
      %p557 = por %p555, %p556
      %p558 = scmp.ne.s32.totalorder %s550, %s553
      %p559 = scmp.eq.s32.totalorder %s42, 0
      %p560 = por %p558, %p559
      %p561 = scmp.ne.s32.totalorder %s550, %s553
      %p562 = scmp.eq.s32.totalorder %s47, 1
      %p563 = por %p561, %p562
      %p564 = scmp.ne.s32.totalorder %s553, %s554
      %p565 = scmp.eq.s32.totalorder %s47, 0
      %p566 = por %p564, %p565
      %p567 = scmp.ne.s32.totalorder %s553, %s554
      %p568 = scmp.eq.s32.totalorder %s48, 1
      %p569 = por %p567, %p568
      %p571 = scmp.ne.s32.totalorder %s554, %s570
      %p572 = scmp.eq.s32.totalorder %s48, 0
      %p573 = por %p571, %p572
      %s574 = ssub.s32 %s42, %s49
      %p575 = scmp.eq.s32.totalorder %s574, 0
      %s577 = sadd.s32 %s576, 1
      %s578 = scalar_select %p575, %s576, %s577
      %p581 = pneg %p575
      %p582 = scmp.eq.s32.totalorder %s42, 1
      %p583 = por %p581, %p582
      %p584 = scmp.ne.s32.totalorder %s576, %s579
      %p585 = scmp.eq.s32.totalorder %s42, 0
      %p586 = por %p584, %p585
      %p587 = scmp.ne.s32.totalorder %s576, %s579
      %p588 = scmp.eq.s32.totalorder %s47, 1
      %p589 = por %p587, %p588
      %p590 = scmp.ne.s32.totalorder %s579, %s580
      %p591 = scmp.eq.s32.totalorder %s47, 0
      %p592 = por %p590, %p591
      %p593 = scmp.ne.s32.totalorder %s579, %s580
      %p594 = scmp.eq.s32.totalorder %s48, 1
      %p595 = por %p593, %p594
      %p597 = scmp.ne.s32.totalorder %s580, %s596
      %p598 = scmp.eq.s32.totalorder %s48, 0
      %p599 = por %p597, %p598
      %p600 = scmp.le.s32.totalorder 1, %s42
      %p601 = scmp.lt.s32.totalorder %s42, 3
      %p602 = pnand %p600, %p601
      %p603 = pneg %p602
      // Predicated region
      $region9: #{inversion_plm_forward.1} parent=5 // pred_check
        _
      $region10: #{inversion_plm_forward.1} parent=5 // pred_check_branch
        %605 = sbr.rel (%p602) target = $region12
      $region11: #{inversion_plm_forward.1} parent=5 // pred_region
        %s606 = ssub.s32 %s42, 1
        // Predicated region
        $region13: #{inversion_plm_forward.1} parent=11 // pred_check
          %p607 = pneg %p141
        $region14: #{inversion_plm_forward.1} parent=11 // pred_check_branch
          %609 = sbr.rel (%p607) target = $region16
        $region15: #{inversion_plm_forward.1} parent=11 // pred_region
          %611 = vsyncadd [#allocation3], 0
          %s613 = sshll.u32 %s3, 4
          %s614 = int_to_ptr.hbm [resolvable:$true] %s613
          %s615 = sshll.u32 [#allocation2], 4
          %s616 = int_to_ptr.vmem [resolvable:$true] %s615
          %618 = dma.hbm_to_vmem [thread:$0]  %s614, 16, %s616, [#allocation3]
        $region16: #{inversion_plm_forward.1} parent=11 // pred_fallthru
          _
        // Predicated region
        $region17: #{inversion_plm_forward.1} parent=11 // pred_check
          %p619 = pneg %p162
        $region18: #{inversion_plm_forward.1} parent=11 // pred_check_branch
          %621 = sbr.rel (%p619) target = $region20
        $region19: #{inversion_plm_forward.1} parent=11 // pred_region
          %623 = vsyncadd [#allocation6], 0
          %s625 = sshll.u32 %s4, 4
          %s626 = int_to_ptr.hbm [resolvable:$true] %s625
          %s627 = sshll.u32 [#allocation5], 4
          %s628 = int_to_ptr.vmem [resolvable:$true] %s627
          %630 = dma.hbm_to_vmem [thread:$0]  %s626, 16, %s628, [#allocation6]
        $region20: #{inversion_plm_forward.1} parent=11 // pred_fallthru
          _
        // Predicated region
        $region21: #{inversion_plm_forward.1} parent=11 // pred_check
          %p631 = pneg %p183
        $region22: #{inversion_plm_forward.1} parent=11 // pred_check_branch
          %633 = sbr.rel (%p631) target = $region24
        $region23: #{inversion_plm_forward.1} parent=11 // pred_region
          _
        $region24: #{inversion_plm_forward.1} parent=11 // pred_fallthru
          _
        // Predicated region
        $region25: #{inversion_plm_forward.1} parent=11 // pred_check
          %p634 = pneg %p204
        $region26: #{inversion_plm_forward.1} parent=11 // pred_check_branch
          %636 = sbr.rel (%p634) target = $region28
        $region27: #{inversion_plm_forward.1} parent=11 // pred_region
          %638 = vsyncadd [#allocation6], 0
          %s639 = sshll.u32 %s6, 4
          %s640 = int_to_ptr.hbm [resolvable:$true] %s639
          %s641 = sshll.u32 [#allocation7], 4
          %s642 = int_to_ptr.vmem [resolvable:$true] %s641
          %647 = dma.hbm_to_vmem [thread:$0]  %s640, 32, %s642, [#allocation6], 16, 16, 1
        $region28: #{inversion_plm_forward.1} parent=11 // pred_fallthru
          _
        // Predicated region
        $region29: #{inversion_plm_forward.1} parent=11 // pred_check
          %p648 = pneg %p225
        $region30: #{inversion_plm_forward.1} parent=11 // pred_check_branch
          %650 = sbr.rel (%p648) target = $region32
        $region31: #{inversion_plm_forward.1} parent=11 // pred_region
          _
        $region32: #{inversion_plm_forward.1} parent=11 // pred_fallthru
          _
        // Predicated region
        $region33: #{inversion_plm_forward.1} parent=11 // pred_check
          %p651 = pneg %p246
        $region34: #{inversion_plm_forward.1} parent=11 // pred_check_branch
          %653 = sbr.rel (%p651) target = $region36
        $region35: #{inversion_plm_forward.1} parent=11 // pred_region
          %655 = vsyncadd [#allocation9], 0
          %s656 = sshll.u32 %s8, 4
          %s657 = int_to_ptr.hbm [resolvable:$true] %s656
          %s658 = sshll.u32 [#allocation8], 4
          %s659 = int_to_ptr.vmem [resolvable:$true] %s658
          %664 = dma.hbm_to_vmem [thread:$0]  %s657, 32, %s659, [#allocation9], 16, 16, 1
        $region36: #{inversion_plm_forward.1} parent=11 // pred_fallthru
          _
        // Predicated region
        $region37: #{inversion_plm_forward.1} parent=11 // pred_check
          %p665 = pneg %p267
        $region38: #{inversion_plm_forward.1} parent=11 // pred_check_branch
          %667 = sbr.rel (%p665) target = $region40
        $region39: #{inversion_plm_forward.1} parent=11 // pred_region
          %669 = vsyncadd [#allocation9], 0
          %s670 = sshll.u32 %s9, 4
          %s671 = int_to_ptr.hbm [resolvable:$true] %s670
          %s672 = sshll.u32 [#allocation10], 4
          %s673 = int_to_ptr.vmem [resolvable:$true] %s672
          %678 = dma.hbm_to_vmem [thread:$0]  %s671, 32, %s673, [#allocation9], 16, 16, 1
        $region40: #{inversion_plm_forward.1} parent=11 // pred_fallthru
          _
        // Predicated region
        $region41: #{inversion_plm_forward.1} parent=11 // pred_check
          %p679 = pneg %p288
        $region42: #{inversion_plm_forward.1} parent=11 // pred_check_branch
          %681 = sbr.rel (%p679) target = $region44
        $region43: #{inversion_plm_forward.1} parent=11 // pred_region
          %683 = vsyncadd [#allocation12], 0
          %s684 = sshll.u32 %s10, 4
          %s685 = int_to_ptr.hbm [resolvable:$true] %s684
          %s686 = sshll.u32 [#allocation11], 4
          %s687 = int_to_ptr.vmem [resolvable:$true] %s686
          %692 = dma.hbm_to_vmem [thread:$0]  %s685, 32, %s687, [#allocation12], 16, 16, 1
        $region44: #{inversion_plm_forward.1} parent=11 // pred_fallthru
          _
        // Predicated region
        $region45: #{inversion_plm_forward.1} parent=11 // pred_check
          %p693 = pneg %p309
        $region46: #{inversion_plm_forward.1} parent=11 // pred_check_branch
          %695 = sbr.rel (%p693) target = $region48
        $region47: #{inversion_plm_forward.1} parent=11 // pred_region
          _
        $region48: #{inversion_plm_forward.1} parent=11 // pred_fallthru
          _
        // Predicated region
        $region49: #{inversion_plm_forward.1} parent=11 // pred_check
          %p696 = pneg %p330
        $region50: #{inversion_plm_forward.1} parent=11 // pred_check_branch
          %698 = sbr.rel (%p696) target = $region52
        $region51: #{inversion_plm_forward.1} parent=11 // pred_region
          %700 = vsyncadd [#allocation12], 0
          %s701 = sshll.u32 %s12, 4
          %s702 = int_to_ptr.hbm [resolvable:$true] %s701
          %s703 = sshll.u32 [#allocation13], 4
          %s704 = int_to_ptr.vmem [resolvable:$true] %s703
          %709 = dma.hbm_to_vmem [thread:$0]  %s702, 32, %s704, [#allocation12], 16, 16, 1
        $region52: #{inversion_plm_forward.1} parent=11 // pred_fallthru
          _
        // Predicated region
        $region53: #{inversion_plm_forward.1} parent=11 // pred_check
          %p710 = pneg %p351
        $region54: #{inversion_plm_forward.1} parent=11 // pred_check_branch
          %712 = sbr.rel (%p710) target = $region56
        $region55: #{inversion_plm_forward.1} parent=11 // pred_region
          _
        $region56: #{inversion_plm_forward.1} parent=11 // pred_fallthru
          _
        // Predicated region
        $region57: #{inversion_plm_forward.1} parent=11 // pred_check
          %p713 = pneg %p372
        $region58: #{inversion_plm_forward.1} parent=11 // pred_check_branch
          %715 = sbr.rel (%p713) target = $region60
        $region59: #{inversion_plm_forward.1} parent=11 // pred_region
          %717 = vsyncadd [#allocation15], 0
          %s718 = sshll.u32 %s14, 4
          %s719 = int_to_ptr.hbm [resolvable:$true] %s718
          %s720 = sshll.u32 [#allocation14], 4
          %s721 = int_to_ptr.vmem [resolvable:$true] %s720
          %726 = dma.hbm_to_vmem [thread:$0]  %s719, 32, %s721, [#allocation15], 16, 16, 1
        $region60: #{inversion_plm_forward.1} parent=11 // pred_fallthru
          _
        // Predicated region
        $region61: #{inversion_plm_forward.1} parent=11 // pred_check
          %p727 = pneg %p393
        $region62: #{inversion_plm_forward.1} parent=11 // pred_check_branch
          %729 = sbr.rel (%p727) target = $region64
        $region63: #{inversion_plm_forward.1} parent=11 // pred_region
          %731 = vsyncadd [#allocation15], 0
          %s732 = sshll.u32 %s15, 4
          %s733 = int_to_ptr.hbm [resolvable:$true] %s732
          %s734 = sshll.u32 [#allocation16], 4
          %s735 = int_to_ptr.vmem [resolvable:$true] %s734
          %740 = dma.hbm_to_vmem [thread:$0]  %s733, 32, %s735, [#allocation15], 16, 16, 1
        $region64: #{inversion_plm_forward.1} parent=11 // pred_fallthru
          _
        // Predicated region
        $region65: #{inversion_plm_forward.1} parent=11 // pred_check
          %p741 = pneg %p414
        $region66: #{inversion_plm_forward.1} parent=11 // pred_check_branch
          %743 = sbr.rel (%p741) target = $region68
        $region67: #{inversion_plm_forward.1} parent=11 // pred_region
          %745 = vsyncadd [#allocation18], 0
          %s746 = sshll.u32 %s16, 4
          %s747 = int_to_ptr.hbm [resolvable:$true] %s746
          %s748 = sshll.u32 [#allocation17], 4
          %s749 = int_to_ptr.vmem [resolvable:$true] %s748
          %754 = dma.hbm_to_vmem [thread:$0]  %s747, 32, %s749, [#allocation18], 16, 16, 1
        $region68: #{inversion_plm_forward.1} parent=11 // pred_fallthru
          _
        // Predicated region
        $region69: #{inversion_plm_forward.1} parent=11 // pred_check
          %p755 = pneg %p435
        $region70: #{inversion_plm_forward.1} parent=11 // pred_check_branch
          %757 = sbr.rel (%p755) target = $region72
        $region71: #{inversion_plm_forward.1} parent=11 // pred_region
          _
        $region72: #{inversion_plm_forward.1} parent=11 // pred_fallthru
          _
        // Predicated region
        $region73: #{inversion_plm_forward.1} parent=11 // pred_check
          %p758 = pneg %p456
        $region74: #{inversion_plm_forward.1} parent=11 // pred_check_branch
          %760 = sbr.rel (%p758) target = $region76
        $region75: #{inversion_plm_forward.1} parent=11 // pred_region
          %762 = vsyncadd [#allocation18], 0
          %s764 = sshll.u32 %s18, 4
          %s765 = int_to_ptr.hbm [resolvable:$true] %s764
          %s766 = sshll.u32 [#allocation19], 4
          %s767 = int_to_ptr.vmem [resolvable:$true] %s766
          %769 = dma.hbm_to_vmem [thread:$0]  %s765, 16, %s767, [#allocation18]
        $region76: #{inversion_plm_forward.1} parent=11 // pred_fallthru
          _
        // Predicated region
        $region77: #{inversion_plm_forward.1} parent=11 // pred_check
          %p770 = pneg %p477
        $region78: #{inversion_plm_forward.1} parent=11 // pred_check_branch
          %772 = sbr.rel (%p770) target = $region80
        $region79: #{inversion_plm_forward.1} parent=11 // pred_region
          %774 = vsyncadd [#allocation21], 0
          %s776 = sshll.u32 %s19, 4
          %s777 = int_to_ptr.hbm [resolvable:$true] %s776
          %s778 = sshll.u32 [#allocation20], 4
          %s779 = int_to_ptr.vmem [resolvable:$true] %s778
          %781 = dma.hbm_to_vmem [thread:$0]  %s777, 16, %s779, [#allocation21]
        $region80: #{inversion_plm_forward.1} parent=11 // pred_fallthru
          _
        // Predicated region
        $region81: #{inversion_plm_forward.1} parent=11 // pred_check
          %p782 = pneg %p498
        $region82: #{inversion_plm_forward.1} parent=11 // pred_check_branch
          %784 = sbr.rel (%p782) target = $region84
        $region83: #{inversion_plm_forward.1} parent=11 // pred_region
          %786 = vsyncadd [#allocation21], 0
          %s788 = sshll.u32 %s20, 4
          %s789 = int_to_ptr.hbm [resolvable:$true] %s788
          %s790 = sshll.u32 [#allocation22], 4
          %s791 = int_to_ptr.vmem [resolvable:$true] %s790
          %793 = dma.hbm_to_vmem [thread:$0]  %s789, 16, %s791, [#allocation21]
        $region84: #{inversion_plm_forward.1} parent=11 // pred_fallthru
          _
        // Predicated region
        $region85: #{inversion_plm_forward.1} parent=11 // pred_check
          %p794 = pneg %p519
        $region86: #{inversion_plm_forward.1} parent=11 // pred_check_branch
          %796 = sbr.rel (%p794) target = $region88
        $region87: #{inversion_plm_forward.1} parent=11 // pred_region
          _
        $region88: #{inversion_plm_forward.1} parent=11 // pred_fallthru
          _
        // Predicated region
        $region89: #{inversion_plm_forward.1} parent=11 // pred_check
          %p797 = pneg %p540
        $region90: #{inversion_plm_forward.1} parent=11 // pred_check_branch
          %799 = sbr.rel (%p797) target = $region92
        $region91: #{inversion_plm_forward.1} parent=11 // pred_region
          %801 = vsyncadd [#allocation24], 0
          %s803 = sshll.u32 %s22, 4
          %s804 = int_to_ptr.hbm [resolvable:$true] %s803
          %s805 = sshll.u32 [#allocation23], 4
          %s806 = int_to_ptr.vmem [resolvable:$true] %s805
          %808 = dma.hbm_to_vmem [thread:$0]  %s804, 16, %s806, [#allocation24]
        $region92: #{inversion_plm_forward.1} parent=11 // pred_fallthru
          _
      $region12: #{inversion_plm_forward.1} parent=5 // pred_fallthru
        _
      %p809 = scmp.lt.s32.totalorder %s42, 2
      // Predicated region
      $region93: #{inversion_plm_forward.1} parent=5 // pred_check
        %p810 = pneg %p809
      $region94: #{inversion_plm_forward.1} parent=5 // pred_check_branch
        %812 = sbr.rel (%p810) target = $region96
      $region95: #{inversion_plm_forward.1} parent=5 // pred_region
        // Predicated region
        $region97: #{inversion_plm_forward.1} parent=95 // pred_check
          %p813 = pneg %p62
        $region98: #{inversion_plm_forward.1} parent=95 // pred_check_branch
          %815 = sbr.rel (%p813) target = $region100
        $region99: #{inversion_plm_forward.1} parent=95 // pred_region
          %p816 = scmp.lt.s32.totalorder %s42, 1
          %s817 = scalar_select %p816, %s42, 1
          %s818 = smul.addr %s817, 8
          %s819 = scalar_lea.vmem %s0, %s818
        $region100: #{inversion_plm_forward.1} parent=95 // pred_fallthru
          _
        // Predicated region
        $region101: #{inversion_plm_forward.1} parent=95 // pred_check
          %p820 = pneg %p88
        $region102: #{inversion_plm_forward.1} parent=95 // pred_check_branch
          %822 = sbr.rel (%p820) target = $region104
        $region103: #{inversion_plm_forward.1} parent=95 // pred_region
          %p823 = scmp.lt.s32.totalorder %s42, 1
          %s824 = scalar_select %p823, %s42, 1
          %s825 = scalar_lea.vmem %s1, %s824
        $region104: #{inversion_plm_forward.1} parent=95 // pred_fallthru
          _
        // Predicated region
        $region105: #{inversion_plm_forward.1} parent=95 // pred_check
          %p826 = pneg %p114
        $region106: #{inversion_plm_forward.1} parent=95 // pred_check_branch
          %828 = sbr.rel (%p826) target = $region108
        $region107: #{inversion_plm_forward.1} parent=95 // pred_region
          %p829 = scmp.lt.s32.totalorder %s42, 1
          %s830 = scalar_select %p829, %s42, 1
          %s831 = smul.addr %s830, 8
          %s832 = scalar_lea.vmem %s2, %s831
        $region108: #{inversion_plm_forward.1} parent=95 // pred_fallthru
          _
      $region96: #{inversion_plm_forward.1} parent=5 // pred_fallthru
        _
      %p833 = scmp.le.s32.totalorder 1, %s42
      %p834 = scmp.lt.s32.totalorder %s42, 3
      %p835 = pnand %p833, %p834
      %p836 = pneg %p835
      // Predicated region
      $region109: #{inversion_plm_forward.1} parent=5 // pred_check
        _
      $region110: #{inversion_plm_forward.1} parent=5 // pred_check_branch
        %838 = sbr.rel (%p835) target = $region112
      $region111: #{inversion_plm_forward.1} parent=5 // pred_region
        %s839 = ssub.s32 %s42, 1
        // Predicated region
        $region113: #{inversion_plm_forward.1} parent=111 // pred_check
          %p840 = pneg %p141
        $region114: #{inversion_plm_forward.1} parent=111 // pred_check_branch
          %842 = sbr.rel (%p840) target = $region116
        $region115: #{inversion_plm_forward.1} parent=111 // pred_region
          %844 = dma.done [#allocation3], 16
        $region116: #{inversion_plm_forward.1} parent=111 // pred_fallthru
          _
        // Predicated region
        $region117: #{inversion_plm_forward.1} parent=111 // pred_check
          %p845 = pneg %p162
        $region118: #{inversion_plm_forward.1} parent=111 // pred_check_branch
          %847 = sbr.rel (%p845) target = $region120
        $region119: #{inversion_plm_forward.1} parent=111 // pred_region
          %849 = dma.done [#allocation6], 16
        $region120: #{inversion_plm_forward.1} parent=111 // pred_fallthru
          _
        // Predicated region
        $region121: #{inversion_plm_forward.1} parent=111 // pred_check
          %p850 = pneg %p204
        $region122: #{inversion_plm_forward.1} parent=111 // pred_check_branch
          %852 = sbr.rel (%p850) target = $region124
        $region123: #{inversion_plm_forward.1} parent=111 // pred_region
          %854 = dma.done [#allocation6], 32
        $region124: #{inversion_plm_forward.1} parent=111 // pred_fallthru
          _
        // Predicated region
        $region125: #{inversion_plm_forward.1} parent=111 // pred_check
          %p855 = pneg %p246
        $region126: #{inversion_plm_forward.1} parent=111 // pred_check_branch
          %857 = sbr.rel (%p855) target = $region128
        $region127: #{inversion_plm_forward.1} parent=111 // pred_region
          %859 = dma.done [#allocation9], 32
        $region128: #{inversion_plm_forward.1} parent=111 // pred_fallthru
          _
        // Predicated region
        $region129: #{inversion_plm_forward.1} parent=111 // pred_check
          %p860 = pneg %p267
        $region130: #{inversion_plm_forward.1} parent=111 // pred_check_branch
          %862 = sbr.rel (%p860) target = $region132
        $region131: #{inversion_plm_forward.1} parent=111 // pred_region
          %864 = dma.done [#allocation9], 32
        $region132: #{inversion_plm_forward.1} parent=111 // pred_fallthru
          _
        // Predicated region
        $region133: #{inversion_plm_forward.1} parent=111 // pred_check
          %p865 = pneg %p288
        $region134: #{inversion_plm_forward.1} parent=111 // pred_check_branch
          %867 = sbr.rel (%p865) target = $region136
        $region135: #{inversion_plm_forward.1} parent=111 // pred_region
          %869 = dma.done [#allocation12], 32
        $region136: #{inversion_plm_forward.1} parent=111 // pred_fallthru
          _
        // Predicated region
        $region137: #{inversion_plm_forward.1} parent=111 // pred_check
          %p870 = pneg %p330
        $region138: #{inversion_plm_forward.1} parent=111 // pred_check_branch
          %872 = sbr.rel (%p870) target = $region140
        $region139: #{inversion_plm_forward.1} parent=111 // pred_region
          %874 = dma.done [#allocation12], 32
        $region140: #{inversion_plm_forward.1} parent=111 // pred_fallthru
          _
        // Predicated region
        $region141: #{inversion_plm_forward.1} parent=111 // pred_check
          %p875 = pneg %p372
        $region142: #{inversion_plm_forward.1} parent=111 // pred_check_branch
          %877 = sbr.rel (%p875) target = $region144
        $region143: #{inversion_plm_forward.1} parent=111 // pred_region
          %879 = dma.done [#allocation15], 32
        $region144: #{inversion_plm_forward.1} parent=111 // pred_fallthru
          _
        // Predicated region
        $region145: #{inversion_plm_forward.1} parent=111 // pred_check
          %p880 = pneg %p393
        $region146: #{inversion_plm_forward.1} parent=111 // pred_check_branch
          %882 = sbr.rel (%p880) target = $region148
        $region147: #{inversion_plm_forward.1} parent=111 // pred_region
          %884 = dma.done [#allocation15], 32
        $region148: #{inversion_plm_forward.1} parent=111 // pred_fallthru
          _
        // Predicated region
        $region149: #{inversion_plm_forward.1} parent=111 // pred_check
          %p885 = pneg %p414
        $region150: #{inversion_plm_forward.1} parent=111 // pred_check_branch
          %887 = sbr.rel (%p885) target = $region152
        $region151: #{inversion_plm_forward.1} parent=111 // pred_region
          %889 = dma.done [#allocation18], 32
        $region152: #{inversion_plm_forward.1} parent=111 // pred_fallthru
          _
        // Predicated region
        $region153: #{inversion_plm_forward.1} parent=111 // pred_check
          %p890 = pneg %p456
        $region154: #{inversion_plm_forward.1} parent=111 // pred_check_branch
          %892 = sbr.rel (%p890) target = $region156
        $region155: #{inversion_plm_forward.1} parent=111 // pred_region
          %894 = dma.done [#allocation18], 16
        $region156: #{inversion_plm_forward.1} parent=111 // pred_fallthru
          _
        // Predicated region
        $region157: #{inversion_plm_forward.1} parent=111 // pred_check
          %p895 = pneg %p477
        $region158: #{inversion_plm_forward.1} parent=111 // pred_check_branch
          %897 = sbr.rel (%p895) target = $region160
        $region159: #{inversion_plm_forward.1} parent=111 // pred_region
          %899 = dma.done [#allocation21], 16
        $region160: #{inversion_plm_forward.1} parent=111 // pred_fallthru
          _
        // Predicated region
        $region161: #{inversion_plm_forward.1} parent=111 // pred_check
          %p900 = pneg %p498
        $region162: #{inversion_plm_forward.1} parent=111 // pred_check_branch
          %902 = sbr.rel (%p900) target = $region164
        $region163: #{inversion_plm_forward.1} parent=111 // pred_region
          %904 = dma.done [#allocation21], 16
        $region164: #{inversion_plm_forward.1} parent=111 // pred_fallthru
          _
        // Predicated region
        $region165: #{inversion_plm_forward.1} parent=111 // pred_check
          %p905 = pneg %p540
        $region166: #{inversion_plm_forward.1} parent=111 // pred_check_branch
          %907 = sbr.rel (%p905) target = $region168
        $region167: #{inversion_plm_forward.1} parent=111 // pred_region
          %909 = dma.done [#allocation24], 16
        $region168: #{inversion_plm_forward.1} parent=111 // pred_fallthru
          _
        %p910 = scmp.lt.s32.totalorder %s47, 1
        %s911 = scalar_select %p910, %s47, 1
        %s912 = smul.addr %s911, 8
        %s913 = scalar_lea.vmem %s0, %s912
        %p914 = pneg %p68
        %p915 = pneg %p65
        %p916 = scmp.lt.s32.totalorder %s47, 1
        %s917 = scalar_select %p916, %s47, 1
        %s918 = scalar_lea.vmem %s1, %s917
        %p919 = pneg %p94
        %p920 = pneg %p91
        %p921 = scmp.lt.s32.totalorder %s47, 1
        %s922 = scalar_select %p921, %s47, 1
        %s923 = smul.addr %s922, 8
        %s924 = scalar_lea.vmem %s2, %s923
        %p925 = pneg %p120
        %p926 = pneg %p117
        %p927 = pneg %p141
        %p928 = pneg %p138
        %p929 = pneg %p162
        %p930 = pneg %p159
        %p931 = pneg %p183
        %p932 = pneg %p180
        %p933 = pneg %p204
        %p934 = pneg %p201
        %p935 = pneg %p225
        %p936 = pneg %p222
        %p937 = pneg %p246
        %p938 = pneg %p243
        %p939 = pneg %p267
        %p940 = pneg %p264
        %p941 = pneg %p288
        %p942 = pneg %p285
        %p943 = pneg %p309
        %p944 = pneg %p306
        %p945 = pneg %p330
        %p946 = pneg %p327
        %p947 = pneg %p351
        %p948 = pneg %p348
        %p949 = pneg %p372
        %p950 = pneg %p369
        %p951 = pneg %p393
        %p952 = pneg %p390
        %p953 = pneg %p414
        %p954 = pneg %p411
        %p955 = pneg %p435
        %p956 = pneg %p432
        %p957 = pneg %p456
        %p958 = pneg %p453
        %p959 = pneg %p477
        %p960 = pneg %p474
        %p961 = pneg %p498
        %p962 = pneg %p495
        %p963 = pneg %p519
        %p964 = pneg %p516
        %p965 = pneg %p540
        %p966 = pneg %p537
        %p967 = pneg %p566
        %p968 = pneg %p563
        %s969 = sand.u32 %s553, 1
        %s970 = scalar_lea.sflag [#allocation4], %s969
        %s971 = sand.u32 %s553, 1
        %s972 = smul.addr %s971, 8
        %s973 = scalar_lea.vmem [#allocation25], %s972
        %p974 = pneg %p592
        %p975 = pneg %p589
        %p976 = scmp.lt.s32.totalorder %s47, 1
        %s977 = scalar_select %p976, %s47, 1
        %s978 = smul.addr %s977, 8
        %s979 = scalar_lea.vmem %s24, %s978
        %p980 = scmp.lt.s32.totalorder %s47, 1
        %s981 = scalar_select %p980, %s47, 1
        %s982 = smul.addr %s981, 8
        %s983 = scalar_lea.vmem %s0, %s982
        %p984 = scmp.lt.s32.totalorder %s47, 1
        %s985 = scalar_select %p984, %s47, 1
        %s986 = scalar_lea.vmem %s1, %s985
        %p987 = scmp.lt.s32.totalorder %s47, 1
        %s988 = scalar_select %p987, %s47, 1
        %s989 = smul.addr %s988, 8
        %s990 = scalar_lea.vmem %s2, %s989
        %p991 = scmp.lt.s32.totalorder %s47, 1
        %s992 = scalar_select %p991, %s47, 1
        %s993 = smul.addr %s992, 8
        %s994 = scalar_lea.vmem %s24, %s993
        %v995 = vld [vmem:[%s983] sm:$0xff]
        %v996 = vld [vmem:[#allocation2] sm:$0x1]
        %v997 = vld [vmem:[#allocation5] sm:$0x1]
        %vm998 = vcmask 261120
        %v999 = vsel %vm998, %v995, 0.0
        %1000 = vadd.xlane.f32.xlu0 %v999
        %v1001 = vpop.xlane.xlu0 %1000
        %v1002 = vrcp.pop 32.0
        %v1003 = vmul.f32 32.0, %v1002
        %v1004 = vsub.f32 1.0, %v1003
        %v1005 = vmul.f32 %v1002, %v1004
        %v1006 = vadd.f32 %v1002, %v1005
        %vm1007 = vweird.f32 %v1002
        %v1008 = vsel %vm1007, %v1002, %v1006
        %v1009 = vmul.f32 %v1001, %v1008
        %v1010 = vsub.f32 %v995, %v1009
        %v1011 = vmul.f32 %v1010, %v1010
        %v1012 = vsel %vm998, %v1011, 0.0
        %1013 = vadd.xlane.f32.xlu0 %v1012
        %v1014 = vpop.xlane.xlu0 %1013
        %v1015 = vmul.f32 %v1014, %v1008
        %v1016 = vadd.f32 %v1015, 1e-05
        %v1017 = vrsqrt.pop %v1016
        %v1018 = vmul.f32 %v1017, %v1016
        %v1019 = vmul.f32 %v1018, %v1017
        %v1020 = vmul.f32 0.5, %v1019
        %v1021 = vsub.f32 1.5, %v1020
        %v1022 = vmul.f32 %v1017, %v1021
        %vm1023 = vweird.f32 %v1016
        %vm1024 = vweird.f32 %v1017
        %vm1025 = vmor %vm1023, %vm1024
        %v1026 = vsel %vm1025, %v1017, %v1022
        %v1027 = vmul.f32 %v1010, %v1026
        %v1029 = vperm.slane %v996, 0
        %v1031 = vmul.f32 %v1027, %v1029
        %v1033 = vperm.slane %v997, 0
        %v1035 = vadd.f32 %v1031, %v1033
        %v1036 = vld [vmem:[%s986] sm:$0x1]
        %v1037 = vld [vmem:[%s5] sm:$0xff]
        %v1038 = vld [vmem:[%s5 + $0x8] sm:$0xff]
        %v1039 = vld [vmem:[%s5 + $0x10] sm:$0xff]
        %v1040 = vld [vmem:[%s5 + $0x18] sm:$0xff]
        %v1041 = vld [vmem:[#allocation7] sm:$0x1]
        %v1043 = vperm.slane %v1041, 0
        %v1046 = vsel %vm998, %v1035, 0
        %1048 = vmatpush.msra.mxu0 0.0
        %1049 = vmatpush.msra.mxu0 0.0
        %1050 = vmatpush.msra.mxu0 0.0
        %1051 = vmatpush.msra.mxu0 0.0
        %1052 = vmatpush.msra.mxu0 0.0
        %1053 = vmatpush.msra.mxu0 0.0
        %1054 = vmatpush.msra.mxu0 0.0
        %1055 = vmatpush.msra.mxu0 0.0
        %1056 = vmatpush.msra.mxu0 0.0
        %1057 = vmatpush.msra.mxu0 0.0
        %1058 = vmatpush.msra.mxu0 0.0
        %1059 = vmatpush.msra.mxu0 0.0
        %1060 = vmatpush.msra.mxu0 %v1040
        %1061 = vmatpush.msra.mxu0 %v1039
        %1062 = vmatpush.msra.mxu0 %v1038
        %1063 = vmatpush.msra.mxu0 %v1037
        %1064 = vmatmul.f32.gmra.mxu0 %v1046
        %v1065 = vpop.f32.mrf.mxu0
        %v1066 = vadd.f32 %v1043, %v1065
        %1067 = vdwg.mxu0
        %v1068 = vld [vmem:[%s7] sm:$0xff]
        %v1069 = vld [vmem:[%s7 + $0x8] sm:$0xff]
        %v1070 = vld [vmem:[%s7 + $0x10] sm:$0xff]
        %v1071 = vld [vmem:[%s7 + $0x18] sm:$0xff]
        %v1072 = vld [vmem:[#allocation8] sm:$0x1]
        %v1074 = vperm.slane %v1072, 0
        %v1076 = vadd.f32 %v1074, 0.0
        %1078 = vrot.lane.b32.xlu0 %v1066, 96
        %v1079 = vpop.permute.xlu0 %1078
        %vm1080 = vcmask 130048
        %v1081 = vsel %vm1080, %v1066, 0
        %v1083 = vsel %vm1080, %v1079, 0
        %1085 = vmatpush.xpose.msra.mxu0 0.0
        %1086 = vmatpush.xpose.msra.mxu0 0.0
        %1087 = vmatpush.xpose.msra.mxu0 0.0
        %1088 = vmatpush.xpose.msra.mxu0 0.0
        %1089 = vmatpush.xpose.msra.mxu0 0.0
        %1090 = vmatpush.xpose.msra.mxu0 0.0
        %1091 = vmatpush.xpose.msra.mxu0 0.0
        %1092 = vmatpush.xpose.msra.mxu0 0.0
        %1093 = vmatpush.xpose.msra.mxu0 0.0
        %1094 = vmatpush.xpose.msra.mxu0 0.0
        %1095 = vmatpush.xpose.msra.mxu0 0.0
        %1096 = vmatpush.xpose.msra.mxu0 0.0
        %1097 = vmatpush.xpose.msra.mxu0 0.0
        %1098 = vmatpush.xpose.msra.mxu0 0.0
        %1099 = vmatpush.xpose.msra.mxu0 0.0
        %1100 = vmatpush.xpose.msra.mxu0 %v1083
        %1101 = vmatmul.f32.gmra.mxu0 %v1081
        %v1102 = vpop.f32.mrf.mxu0
        %v1103 = vadd.f32 0.0, %v1102
        %1104 = vdwg.mxu0
        %v1105 = vmul.f32 %v1103, 0.25
        %v1107 = vperm.slane %v1036, 0
        %v1109 = vadd.f32 %v1105, %v1107
        %vm1110 = vcmask 64512
        %v1111 = vsel %vm1110, %v1109, -inf
        %1112 = vmax.xlane.f32.xlu0 %v1111
        %v1113 = vpop.xlane.xlu0 %1112
        %v1114 = vsub.f32 %v1109, %v1113
        %v1115 = vmul.f32 %v1114, 1.442695
        %v1116 = vpow.pop %v1115
        %v1117 = vsel %vm1110, %v1116, 0.0
        %1118 = vadd.xlane.f32.xlu0 %v1117
        %v1119 = vpop.xlane.xlu0 %1118
        %v1120 = vrcp.pop %v1119
        %v1121 = vmul.f32 %v1119, %v1120
        %v1122 = vsub.f32 1.0, %v1121
        %v1123 = vmul.f32 %v1120, %v1122
        %v1124 = vadd.f32 %v1120, %v1123
        %vm1125 = vweird.f32 %v1119
        %vm1126 = vweird.f32 %v1120
        %vm1127 = vmor %vm1125, %vm1126
        %v1128 = vsel %vm1127, %v1120, %v1124
        %v1129 = vand.u32 2147483647, %v1119
        %vm1130 = vcmp.eq.f32.partialorder %v1129, 8.507059e+37
        %v1131 = vand.u32 %v1119, 2147483648
        %v1132 = vor.u32 1.1754944e-38, %v1131
        %v1133 = vsel %vm1130, %v1132, %v1128
        %v1134 = vmul.f32 %v1116, %v1133
        %1135 = vrot.lane.b32.xlu0 %v1066, 64
        %v1136 = vpop.permute.xlu0 %1135
        %v1139 = vsel %vm1110, %v1134, 0
        %1141 = vmatpush.msra.mxu0 0.0
        %1142 = vmatpush.msra.mxu0 0.0
        %1143 = vmatpush.msra.mxu0 0.0
        %1144 = vmatpush.msra.mxu0 0.0
        %1145 = vmatpush.msra.mxu0 0.0
        %1146 = vmatpush.msra.mxu0 0.0
        %1147 = vmatpush.msra.mxu0 0.0
        %1148 = vmatpush.msra.mxu0 0.0
        %1149 = vmatpush.msra.mxu0 0.0
        %1150 = vmatpush.msra.mxu0 0.0
        %1151 = vmatpush.msra.mxu0 0.0
        %1152 = vmatpush.msra.mxu0 0.0
        %1153 = vmatpush.msra.mxu0 0.0
        %1154 = vmatpush.msra.mxu0 0.0
        %1155 = vmatpush.msra.mxu0 0.0
        %1156 = vmatpush.msra.mxu0 %v1136
        %1157 = vmatmul.f32.gmra.mxu0 %v1139
        %v1158 = vpop.f32.mrf.mxu0
        %v1159 = vadd.f32 0.0, %v1158
        %1160 = vdwg.mxu0
        %v1162 = vsel %vm1080, %v1159, 0
        %1164 = vmatpush.msra.mxu0 0.0
        %1165 = vmatpush.msra.mxu0 0.0
        %1166 = vmatpush.msra.mxu0 0.0
        %1167 = vmatpush.msra.mxu0 0.0
        %1168 = vmatpush.msra.mxu0 0.0
        %1169 = vmatpush.msra.mxu0 0.0
        %1170 = vmatpush.msra.mxu0 0.0
        %1171 = vmatpush.msra.mxu0 0.0
        %1172 = vmatpush.msra.mxu0 0.0
        %1173 = vmatpush.msra.mxu0 0.0
        %1174 = vmatpush.msra.mxu0 0.0
        %1175 = vmatpush.msra.mxu0 0.0
        %1176 = vmatpush.msra.mxu0 0.0
        %1177 = vmatpush.msra.mxu0 0.0
        %1178 = vmatpush.msra.mxu0 %v1069
        %1179 = vmatpush.msra.mxu0 %v1068
        %1180 = vmatmul.f32.gmra.mxu0 %v1162
        %v1181 = vpop.f32.mrf.mxu0
        %v1182 = vadd.f32 0.0, %v1181
        %1183 = vdwg.mxu0
        %v1184 = vadd.f32 %v1076, %v1182
        %1185 = vrot.lane.b32.xlu0 %v1066, 112
        %v1186 = vpop.permute.xlu0 %1185
        %1187 = vrot.lane.b32.xlu0 %v1066, 80
        %v1188 = vpop.permute.xlu0 %1187
        %v1189 = vsel %vm1080, %v1186, 0
        %v1191 = vsel %vm1080, %v1188, 0
        %1193 = vmatpush.xpose.msra.mxu0 0.0
        %1194 = vmatpush.xpose.msra.mxu0 0.0
        %1195 = vmatpush.xpose.msra.mxu0 0.0
        %1196 = vmatpush.xpose.msra.mxu0 0.0
        %1197 = vmatpush.xpose.msra.mxu0 0.0
        %1198 = vmatpush.xpose.msra.mxu0 0.0
        %1199 = vmatpush.xpose.msra.mxu0 0.0
        %1200 = vmatpush.xpose.msra.mxu0 0.0
        %1201 = vmatpush.xpose.msra.mxu0 0.0
        %1202 = vmatpush.xpose.msra.mxu0 0.0
        %1203 = vmatpush.xpose.msra.mxu0 0.0
        %1204 = vmatpush.xpose.msra.mxu0 0.0
        %1205 = vmatpush.xpose.msra.mxu0 0.0
        %1206 = vmatpush.xpose.msra.mxu0 0.0
        %1207 = vmatpush.xpose.msra.mxu0 0.0
        %1208 = vmatpush.xpose.msra.mxu0 %v1191
        %1209 = vmatmul.f32.gmra.mxu0 %v1189
        %v1210 = vpop.f32.mrf.mxu0
        %v1211 = vadd.f32 0.0, %v1210
        %1212 = vdwg.mxu0
        %v1213 = vmul.f32 %v1211, 0.25
        %v1214 = vadd.f32 %v1213, %v1107
        %v1215 = vsel %vm1110, %v1214, -inf
        %1216 = vmax.xlane.f32.xlu0 %v1215
        %v1217 = vpop.xlane.xlu0 %1216
        %v1218 = vsub.f32 %v1214, %v1217
        %v1219 = vmul.f32 %v1218, 1.442695
        %v1220 = vpow.pop %v1219
        %v1221 = vsel %vm1110, %v1220, 0.0
        %1222 = vadd.xlane.f32.xlu0 %v1221
        %v1223 = vpop.xlane.xlu0 %1222
        %v1224 = vrcp.pop %v1223
        %v1225 = vmul.f32 %v1223, %v1224
        %v1226 = vsub.f32 1.0, %v1225
        %v1227 = vmul.f32 %v1224, %v1226
        %v1228 = vadd.f32 %v1224, %v1227
        %vm1229 = vweird.f32 %v1223
        %vm1230 = vweird.f32 %v1224
        %vm1231 = vmor %vm1229, %vm1230
        %v1232 = vsel %vm1231, %v1224, %v1228
        %v1233 = vand.u32 2147483647, %v1223
        %vm1234 = vcmp.eq.f32.partialorder %v1233, 8.507059e+37
        %v1235 = vand.u32 %v1223, 2147483648
        %v1236 = vor.u32 1.1754944e-38, %v1235
        %v1237 = vsel %vm1234, %v1236, %v1232
        %v1238 = vmul.f32 %v1220, %v1237
        %1239 = vrot.lane.b32.xlu0 %v1066, 48
        %v1240 = vpop.permute.xlu0 %1239
        %v1243 = vsel %vm1110, %v1238, 0
        %1245 = vmatpush.msra.mxu0 0.0
        %1246 = vmatpush.msra.mxu0 0.0
        %1247 = vmatpush.msra.mxu0 0.0
        %1248 = vmatpush.msra.mxu0 0.0
        %1249 = vmatpush.msra.mxu0 0.0
        %1250 = vmatpush.msra.mxu0 0.0
        %1251 = vmatpush.msra.mxu0 0.0
        %1252 = vmatpush.msra.mxu0 0.0
        %1253 = vmatpush.msra.mxu0 0.0
        %1254 = vmatpush.msra.mxu0 0.0
        %1255 = vmatpush.msra.mxu0 0.0
        %1256 = vmatpush.msra.mxu0 0.0
        %1257 = vmatpush.msra.mxu0 0.0
        %1258 = vmatpush.msra.mxu0 0.0
        %1259 = vmatpush.msra.mxu0 0.0
        %1260 = vmatpush.msra.mxu0 %v1240
        %1261 = vmatmul.f32.gmra.mxu0 %v1243
        %v1262 = vpop.f32.mrf.mxu0
        %v1263 = vadd.f32 0.0, %v1262
        %1264 = vdwg.mxu0
        %v1266 = vsel %vm1080, %v1263, 0
        %1268 = vmatpush.msra.mxu0 0.0
        %1269 = vmatpush.msra.mxu0 0.0
        %1270 = vmatpush.msra.mxu0 0.0
        %1271 = vmatpush.msra.mxu0 0.0
        %1272 = vmatpush.msra.mxu0 0.0
        %1273 = vmatpush.msra.mxu0 0.0
        %1274 = vmatpush.msra.mxu0 0.0
        %1275 = vmatpush.msra.mxu0 0.0
        %1276 = vmatpush.msra.mxu0 0.0
        %1277 = vmatpush.msra.mxu0 0.0
        %1278 = vmatpush.msra.mxu0 0.0
        %1279 = vmatpush.msra.mxu0 0.0
        %1280 = vmatpush.msra.mxu0 0.0
        %1281 = vmatpush.msra.mxu0 0.0
        %1282 = vmatpush.msra.mxu0 %v1071
        %1283 = vmatpush.msra.mxu0 %v1070
        %1284 = vmatmul.f32.gmra.mxu0 %v1266
        %v1285 = vpop.f32.mrf.mxu0
        %v1286 = vadd.f32 0.0, %v1285
        %1287 = vdwg.mxu0
        %v1288 = vadd.f32 %v1184, %v1286
        %v1289 = vadd.f32 %v1288, %v1035
        %v1290 = vld [vmem:[#allocation10] sm:$0x1]
        %v1291 = vld [vmem:[#allocation11] sm:$0x1]
        %v1292 = vsel %vm998, %v1289, 0.0
        %1293 = vadd.xlane.f32.xlu0 %v1292
        %v1294 = vpop.xlane.xlu0 %1293
        %v1295 = vmul.f32 %v1294, %v1008
        %v1296 = vsub.f32 %v1289, %v1295
        %v1297 = vmul.f32 %v1296, %v1296
        %v1298 = vsel %vm998, %v1297, 0.0
        %1299 = vadd.xlane.f32.xlu0 %v1298
        %v1300 = vpop.xlane.xlu0 %1299
        %v1301 = vmul.f32 %v1300, %v1008
        %v1302 = vadd.f32 %v1301, 1e-05
        %v1303 = vrsqrt.pop %v1302
        %v1304 = vmul.f32 %v1303, %v1302
        %v1305 = vmul.f32 %v1304, %v1303
        %v1306 = vmul.f32 0.5, %v1305
        %v1307 = vsub.f32 1.5, %v1306
        %v1308 = vmul.f32 %v1303, %v1307
        %vm1309 = vweird.f32 %v1302
        %vm1310 = vweird.f32 %v1303
        %vm1311 = vmor %vm1309, %vm1310
        %v1312 = vsel %vm1311, %v1303, %v1308
        %v1313 = vmul.f32 %v1296, %v1312
        %v1315 = vperm.slane %v1290, 0
        %v1317 = vmul.f32 %v1313, %v1315
        %v1319 = vperm.slane %v1291, 0
        %v1321 = vadd.f32 %v1317, %v1319
        %v1322 = vld [vmem:[%s11] sm:$0xff]
        %v1323 = vld [vmem:[%s11 + $0x8] sm:$0xff]
        %v1324 = vld [vmem:[%s11 + $0x10] sm:$0xff]
        %v1325 = vld [vmem:[%s11 + $0x18] sm:$0xff]
        %v1326 = vld [vmem:[#allocation13] sm:$0x1]
        %v1328 = vperm.slane %v1326, 0
        %v1331 = vsel %vm998, %v1321, 0
        %1333 = vmatpush.msra.mxu0 0.0
        %1334 = vmatpush.msra.mxu0 0.0
        %1335 = vmatpush.msra.mxu0 0.0
        %1336 = vmatpush.msra.mxu0 0.0
        %1337 = vmatpush.msra.mxu0 0.0
        %1338 = vmatpush.msra.mxu0 0.0
        %1339 = vmatpush.msra.mxu0 0.0
        %1340 = vmatpush.msra.mxu0 0.0
        %1341 = vmatpush.msra.mxu0 0.0
        %1342 = vmatpush.msra.mxu0 0.0
        %1343 = vmatpush.msra.mxu0 0.0
        %1344 = vmatpush.msra.mxu0 0.0
        %1345 = vmatpush.msra.mxu0 %v1325
        %1346 = vmatpush.msra.mxu0 %v1324
        %1347 = vmatpush.msra.mxu0 %v1323
        %1348 = vmatpush.msra.mxu0 %v1322
        %1349 = vmatmul.f32.gmra.mxu0 %v1331
        %v1350 = vpop.f32.mrf.mxu0
        %v1351 = vadd.f32 %v1328, %v1350
        %1352 = vdwg.mxu0
        %v1353 = vmul.f32 %v1351, 0.5
        %v1354 = vmul.f32 %v1351, 0.044715
        %v1355 = vmul.f32 %v1354, %v1351
        %v1356 = vmul.f32 %v1355, %v1351
        %v1357 = vadd.f32 %v1351, %v1356
        %v1358 = vmul.f32 %v1357, 0.7978846
        %v1359 = vtanh.pop %v1358
        %v1360 = vadd.f32 %v1359, 1.0
        %v1361 = vmul.f32 %v1353, %v1360
        %v1362 = vld [vmem:[%s13] sm:$0xff]
        %v1363 = vld [vmem:[%s13 + $0x8] sm:$0xff]
        %v1364 = vld [vmem:[%s13 + $0x10] sm:$0xff]
        %v1365 = vld [vmem:[%s13 + $0x18] sm:$0xff]
        %v1366 = vld [vmem:[%s13 + $0x20] sm:$0xff]
        %v1367 = vld [vmem:[%s13 + $0x28] sm:$0xff]
        %v1368 = vld [vmem:[%s13 + $0x30] sm:$0xff]
        %v1369 = vld [vmem:[%s13 + $0x38] sm:$0xff]
        %v1370 = vld [vmem:[#allocation14] sm:$0x1]
        %v1372 = vperm.slane %v1370, 0
        %vm1374 = vcmask 523264
        %v1376 = vsel %vm1374, %v1361, 0
        %1378 = vmatpush.msra.mxu0 0.0
        %1379 = vmatpush.msra.mxu0 0.0
        %1380 = vmatpush.msra.mxu0 0.0
        %1381 = vmatpush.msra.mxu0 0.0
        %1382 = vmatpush.msra.mxu0 0.0
        %1383 = vmatpush.msra.mxu0 0.0
        %1384 = vmatpush.msra.mxu0 0.0
        %1385 = vmatpush.msra.mxu0 0.0
        %1386 = vmatpush.msra.mxu0 %v1369
        %1387 = vmatpush.msra.mxu0 %v1368
        %1388 = vmatpush.msra.mxu0 %v1367
        %1389 = vmatpush.msra.mxu0 %v1366
        %1390 = vmatpush.msra.mxu0 %v1365
        %1391 = vmatpush.msra.mxu0 %v1364
        %1392 = vmatpush.msra.mxu0 %v1363
        %1393 = vmatpush.msra.mxu0 %v1362
        %1394 = vmatmul.f32.gmra.mxu0 %v1376
        %v1395 = vpop.f32.mrf.mxu0
        %v1396 = vadd.f32 %v1372, %v1395
        %1397 = vdwg.mxu0
        %v1398 = vadd.f32 %v1396, %v1321
        %v1399 = vld [vmem:[#allocation16] sm:$0x1]
        %v1400 = vld [vmem:[#allocation17] sm:$0x1]
        %v1401 = vsel %vm998, %v1398, 0.0
        %1402 = vadd.xlane.f32.xlu0 %v1401
        %v1403 = vpop.xlane.xlu0 %1402
        %v1404 = vmul.f32 %v1403, %v1008
        %v1405 = vsub.f32 %v1398, %v1404
        %v1406 = vmul.f32 %v1405, %v1405
        %v1407 = vsel %vm998, %v1406, 0.0
        %1408 = vadd.xlane.f32.xlu0 %v1407
        %v1409 = vpop.xlane.xlu0 %1408
        %v1410 = vmul.f32 %v1409, %v1008
        %v1411 = vadd.f32 %v1410, 1e-05
        %v1412 = vrsqrt.pop %v1411
        %v1413 = vmul.f32 %v1412, %v1411
        %v1414 = vmul.f32 %v1413, %v1412
        %v1415 = vmul.f32 0.5, %v1414
        %v1416 = vsub.f32 1.5, %v1415
        %v1417 = vmul.f32 %v1412, %v1416
        %vm1418 = vweird.f32 %v1411
        %vm1419 = vweird.f32 %v1412
        %vm1420 = vmor %vm1418, %vm1419
        %v1421 = vsel %vm1420, %v1412, %v1417
        %v1422 = vmul.f32 %v1405, %v1421
        %v1424 = vperm.slane %v1399, 0
        %v1426 = vmul.f32 %v1422, %v1424
        %v1428 = vperm.slane %v1400, 0
        %v1430 = vadd.f32 %v1426, %v1428
        %s1431 = scalar_lea.vmem %s5, 32
        %v1432 = vld [vmem:[%s1431] sm:$0xff]
        %v1433 = vld [vmem:[%s1431 + $0x8] sm:$0xff]
        %v1434 = vld [vmem:[%s1431 + $0x10] sm:$0xff]
        %v1435 = vld [vmem:[%s1431 + $0x18] sm:$0xff]
        %s1436 = scalar_lea.vmem [#allocation7], 1
        %v1437 = vld [vmem:[%s1436] sm:$0x1]
        %v1439 = vperm.slane %v1437, 0
        %v1442 = vsel %vm998, %v1430, 0
        %1444 = vmatpush.msra.mxu0 0.0
        %1445 = vmatpush.msra.mxu0 0.0
        %1446 = vmatpush.msra.mxu0 0.0
        %1447 = vmatpush.msra.mxu0 0.0
        %1448 = vmatpush.msra.mxu0 0.0
        %1449 = vmatpush.msra.mxu0 0.0
        %1450 = vmatpush.msra.mxu0 0.0
        %1451 = vmatpush.msra.mxu0 0.0
        %1452 = vmatpush.msra.mxu0 0.0
        %1453 = vmatpush.msra.mxu0 0.0
        %1454 = vmatpush.msra.mxu0 0.0
        %1455 = vmatpush.msra.mxu0 0.0
        %1456 = vmatpush.msra.mxu0 %v1435
        %1457 = vmatpush.msra.mxu0 %v1434
        %1458 = vmatpush.msra.mxu0 %v1433
        %1459 = vmatpush.msra.mxu0 %v1432
        %1460 = vmatmul.f32.gmra.mxu0 %v1442
        %v1461 = vpop.f32.mrf.mxu0
        %v1462 = vadd.f32 %v1439, %v1461
        %1463 = vdwg.mxu0
        %s1464 = scalar_lea.vmem %s7, 32
        %v1465 = vld [vmem:[%s1464] sm:$0xff]
        %v1466 = vld [vmem:[%s1464 + $0x8] sm:$0xff]
        %v1467 = vld [vmem:[%s1464 + $0x10] sm:$0xff]
        %v1468 = vld [vmem:[%s1464 + $0x18] sm:$0xff]
        %s1469 = scalar_lea.vmem [#allocation8], 1
        %v1470 = vld [vmem:[%s1469] sm:$0x1]
        %v1472 = vperm.slane %v1470, 0
        %v1474 = vadd.f32 %v1472, 0.0
        %1476 = vrot.lane.b32.xlu0 %v1462, 96
        %v1477 = vpop.permute.xlu0 %1476
        %v1478 = vsel %vm1080, %v1462, 0
        %v1480 = vsel %vm1080, %v1477, 0
        %1482 = vmatpush.xpose.msra.mxu0 0.0
        %1483 = vmatpush.xpose.msra.mxu0 0.0
        %1484 = vmatpush.xpose.msra.mxu0 0.0
        %1485 = vmatpush.xpose.msra.mxu0 0.0
        %1486 = vmatpush.xpose.msra.mxu0 0.0
        %1487 = vmatpush.xpose.msra.mxu0 0.0
        %1488 = vmatpush.xpose.msra.mxu0 0.0
        %1489 = vmatpush.xpose.msra.mxu0 0.0
        %1490 = vmatpush.xpose.msra.mxu0 0.0
        %1491 = vmatpush.xpose.msra.mxu0 0.0
        %1492 = vmatpush.xpose.msra.mxu0 0.0
        %1493 = vmatpush.xpose.msra.mxu0 0.0
        %1494 = vmatpush.xpose.msra.mxu0 0.0
        %1495 = vmatpush.xpose.msra.mxu0 0.0
        %1496 = vmatpush.xpose.msra.mxu0 0.0
        %1497 = vmatpush.xpose.msra.mxu0 %v1480
        %1498 = vmatmul.f32.gmra.mxu0 %v1478
        %v1499 = vpop.f32.mrf.mxu0
        %v1500 = vadd.f32 0.0, %v1499
        %1501 = vdwg.mxu0
        %v1502 = vmul.f32 %v1500, 0.25
        %v1503 = vadd.f32 %v1502, %v1107
        %v1504 = vsel %vm1110, %v1503, -inf
        %1505 = vmax.xlane.f32.xlu0 %v1504
        %v1506 = vpop.xlane.xlu0 %1505
        %v1507 = vsub.f32 %v1503, %v1506
        %v1508 = vmul.f32 %v1507, 1.442695
        %v1509 = vpow.pop %v1508
        %v1510 = vsel %vm1110, %v1509, 0.0
        %1511 = vadd.xlane.f32.xlu0 %v1510
        %v1512 = vpop.xlane.xlu0 %1511
        %v1513 = vrcp.pop %v1512
        %v1514 = vmul.f32 %v1512, %v1513
        %v1515 = vsub.f32 1.0, %v1514
        %v1516 = vmul.f32 %v1513, %v1515
        %v1517 = vadd.f32 %v1513, %v1516
        %vm1518 = vweird.f32 %v1512
        %vm1519 = vweird.f32 %v1513
        %vm1520 = vmor %vm1518, %vm1519
        %v1521 = vsel %vm1520, %v1513, %v1517
        %v1522 = vand.u32 2147483647, %v1512
        %vm1523 = vcmp.eq.f32.partialorder %v1522, 8.507059e+37
        %v1524 = vand.u32 %v1512, 2147483648
        %v1525 = vor.u32 1.1754944e-38, %v1524
        %v1526 = vsel %vm1523, %v1525, %v1521
        %v1527 = vmul.f32 %v1509, %v1526
        %1528 = vrot.lane.b32.xlu0 %v1462, 64
        %v1529 = vpop.permute.xlu0 %1528
        %v1532 = vsel %vm1110, %v1527, 0
        %1534 = vmatpush.msra.mxu0 0.0
        %1535 = vmatpush.msra.mxu0 0.0
        %1536 = vmatpush.msra.mxu0 0.0
        %1537 = vmatpush.msra.mxu0 0.0
        %1538 = vmatpush.msra.mxu0 0.0
        %1539 = vmatpush.msra.mxu0 0.0
        %1540 = vmatpush.msra.mxu0 0.0
        %1541 = vmatpush.msra.mxu0 0.0
        %1542 = vmatpush.msra.mxu0 0.0
        %1543 = vmatpush.msra.mxu0 0.0
        %1544 = vmatpush.msra.mxu0 0.0
        %1545 = vmatpush.msra.mxu0 0.0
        %1546 = vmatpush.msra.mxu0 0.0
        %1547 = vmatpush.msra.mxu0 0.0
        %1548 = vmatpush.msra.mxu0 0.0
        %1549 = vmatpush.msra.mxu0 %v1529
        %1550 = vmatmul.f32.gmra.mxu0 %v1532
        %v1551 = vpop.f32.mrf.mxu0
        %v1552 = vadd.f32 0.0, %v1551
        %1553 = vdwg.mxu0
        %v1555 = vsel %vm1080, %v1552, 0
        %1557 = vmatpush.msra.mxu0 0.0
        %1558 = vmatpush.msra.mxu0 0.0
        %1559 = vmatpush.msra.mxu0 0.0
        %1560 = vmatpush.msra.mxu0 0.0
        %1561 = vmatpush.msra.mxu0 0.0
        %1562 = vmatpush.msra.mxu0 0.0
        %1563 = vmatpush.msra.mxu0 0.0
        %1564 = vmatpush.msra.mxu0 0.0
        %1565 = vmatpush.msra.mxu0 0.0
        %1566 = vmatpush.msra.mxu0 0.0
        %1567 = vmatpush.msra.mxu0 0.0
        %1568 = vmatpush.msra.mxu0 0.0
        %1569 = vmatpush.msra.mxu0 0.0
        %1570 = vmatpush.msra.mxu0 0.0
        %1571 = vmatpush.msra.mxu0 %v1466
        %1572 = vmatpush.msra.mxu0 %v1465
        %1573 = vmatmul.f32.gmra.mxu0 %v1555
        %v1574 = vpop.f32.mrf.mxu0
        %v1575 = vadd.f32 0.0, %v1574
        %1576 = vdwg.mxu0
        %v1577 = vadd.f32 %v1474, %v1575
        %1578 = vrot.lane.b32.xlu0 %v1462, 112
        %v1579 = vpop.permute.xlu0 %1578
        %1580 = vrot.lane.b32.xlu0 %v1462, 80
        %v1581 = vpop.permute.xlu0 %1580
        %v1582 = vsel %vm1080, %v1579, 0
        %v1584 = vsel %vm1080, %v1581, 0
        %1586 = vmatpush.xpose.msra.mxu0 0.0
        %1587 = vmatpush.xpose.msra.mxu0 0.0
        %1588 = vmatpush.xpose.msra.mxu0 0.0
        %1589 = vmatpush.xpose.msra.mxu0 0.0
        %1590 = vmatpush.xpose.msra.mxu0 0.0
        %1591 = vmatpush.xpose.msra.mxu0 0.0
        %1592 = vmatpush.xpose.msra.mxu0 0.0
        %1593 = vmatpush.xpose.msra.mxu0 0.0
        %1594 = vmatpush.xpose.msra.mxu0 0.0
        %1595 = vmatpush.xpose.msra.mxu0 0.0
        %1596 = vmatpush.xpose.msra.mxu0 0.0
        %1597 = vmatpush.xpose.msra.mxu0 0.0
        %1598 = vmatpush.xpose.msra.mxu0 0.0
        %1599 = vmatpush.xpose.msra.mxu0 0.0
        %1600 = vmatpush.xpose.msra.mxu0 0.0
        %1601 = vmatpush.xpose.msra.mxu0 %v1584
        %1602 = vmatmul.f32.gmra.mxu0 %v1582
        %v1603 = vpop.f32.mrf.mxu0
        %v1604 = vadd.f32 0.0, %v1603
        %1605 = vdwg.mxu0
        %v1606 = vmul.f32 %v1604, 0.25
        %v1607 = vadd.f32 %v1606, %v1107
        %v1608 = vsel %vm1110, %v1607, -inf
        %1609 = vmax.xlane.f32.xlu0 %v1608
        %v1610 = vpop.xlane.xlu0 %1609
        %v1611 = vsub.f32 %v1607, %v1610
        %v1612 = vmul.f32 %v1611, 1.442695
        %v1613 = vpow.pop %v1612
        %v1614 = vsel %vm1110, %v1613, 0.0
        %1615 = vadd.xlane.f32.xlu0 %v1614
        %v1616 = vpop.xlane.xlu0 %1615
        %v1617 = vrcp.pop %v1616
        %v1618 = vmul.f32 %v1616, %v1617
        %v1619 = vsub.f32 1.0, %v1618
        %v1620 = vmul.f32 %v1617, %v1619
        %v1621 = vadd.f32 %v1617, %v1620
        %vm1622 = vweird.f32 %v1616
        %vm1623 = vweird.f32 %v1617
        %vm1624 = vmor %vm1622, %vm1623
        %v1625 = vsel %vm1624, %v1617, %v1621
        %v1626 = vand.u32 2147483647, %v1616
        %vm1627 = vcmp.eq.f32.partialorder %v1626, 8.507059e+37
        %v1628 = vand.u32 %v1616, 2147483648
        %v1629 = vor.u32 1.1754944e-38, %v1628
        %v1630 = vsel %vm1627, %v1629, %v1625
        %v1631 = vmul.f32 %v1613, %v1630
        %1632 = vrot.lane.b32.xlu0 %v1462, 48
        %v1633 = vpop.permute.xlu0 %1632
        %v1636 = vsel %vm1110, %v1631, 0
        %1638 = vmatpush.msra.mxu0 0.0
        %1639 = vmatpush.msra.mxu0 0.0
        %1640 = vmatpush.msra.mxu0 0.0
        %1641 = vmatpush.msra.mxu0 0.0
        %1642 = vmatpush.msra.mxu0 0.0
        %1643 = vmatpush.msra.mxu0 0.0
        %1644 = vmatpush.msra.mxu0 0.0
        %1645 = vmatpush.msra.mxu0 0.0
        %1646 = vmatpush.msra.mxu0 0.0
        %1647 = vmatpush.msra.mxu0 0.0
        %1648 = vmatpush.msra.mxu0 0.0
        %1649 = vmatpush.msra.mxu0 0.0
        %1650 = vmatpush.msra.mxu0 0.0
        %1651 = vmatpush.msra.mxu0 0.0
        %1652 = vmatpush.msra.mxu0 0.0
        %1653 = vmatpush.msra.mxu0 %v1633
        %1654 = vmatmul.f32.gmra.mxu0 %v1636
        %v1655 = vpop.f32.mrf.mxu0
        %v1656 = vadd.f32 0.0, %v1655
        %1657 = vdwg.mxu0
        %v1659 = vsel %vm1080, %v1656, 0
        %1661 = vmatpush.msra.mxu0 0.0
        %1662 = vmatpush.msra.mxu0 0.0
        %1663 = vmatpush.msra.mxu0 0.0
        %1664 = vmatpush.msra.mxu0 0.0
        %1665 = vmatpush.msra.mxu0 0.0
        %1666 = vmatpush.msra.mxu0 0.0
        %1667 = vmatpush.msra.mxu0 0.0
        %1668 = vmatpush.msra.mxu0 0.0
        %1669 = vmatpush.msra.mxu0 0.0
        %1670 = vmatpush.msra.mxu0 0.0
        %1671 = vmatpush.msra.mxu0 0.0
        %1672 = vmatpush.msra.mxu0 0.0
        %1673 = vmatpush.msra.mxu0 0.0
        %1674 = vmatpush.msra.mxu0 0.0
        %1675 = vmatpush.msra.mxu0 %v1468
        %1676 = vmatpush.msra.mxu0 %v1467
        %1677 = vmatmul.f32.gmra.mxu0 %v1659
        %v1678 = vpop.f32.mrf.mxu0
        %v1679 = vadd.f32 0.0, %v1678
        %1680 = vdwg.mxu0
        %v1681 = vadd.f32 %v1577, %v1679
        %v1682 = vadd.f32 %v1681, %v1430
        %s1683 = scalar_lea.vmem [#allocation10], 1
        %v1684 = vld [vmem:[%s1683] sm:$0x1]
        %s1685 = scalar_lea.vmem [#allocation11], 1
        %v1686 = vld [vmem:[%s1685] sm:$0x1]
        %v1687 = vsel %vm998, %v1682, 0.0
        %1688 = vadd.xlane.f32.xlu0 %v1687
        %v1689 = vpop.xlane.xlu0 %1688
        %v1690 = vmul.f32 %v1689, %v1008
        %v1691 = vsub.f32 %v1682, %v1690
        %v1692 = vmul.f32 %v1691, %v1691
        %v1693 = vsel %vm998, %v1692, 0.0
        %1694 = vadd.xlane.f32.xlu0 %v1693
        %v1695 = vpop.xlane.xlu0 %1694
        %v1696 = vmul.f32 %v1695, %v1008
        %v1697 = vadd.f32 %v1696, 1e-05
        %v1698 = vrsqrt.pop %v1697
        %v1699 = vmul.f32 %v1698, %v1697
        %v1700 = vmul.f32 %v1699, %v1698
        %v1701 = vmul.f32 0.5, %v1700
        %v1702 = vsub.f32 1.5, %v1701
        %v1703 = vmul.f32 %v1698, %v1702
        %vm1704 = vweird.f32 %v1697
        %vm1705 = vweird.f32 %v1698
        %vm1706 = vmor %vm1704, %vm1705
        %v1707 = vsel %vm1706, %v1698, %v1703
        %v1708 = vmul.f32 %v1691, %v1707
        %v1710 = vperm.slane %v1684, 0
        %v1712 = vmul.f32 %v1708, %v1710
        %v1714 = vperm.slane %v1686, 0
        %v1716 = vadd.f32 %v1712, %v1714
        %s1717 = scalar_lea.vmem %s11, 32
        %v1718 = vld [vmem:[%s1717] sm:$0xff]
        %v1719 = vld [vmem:[%s1717 + $0x8] sm:$0xff]
        %v1720 = vld [vmem:[%s1717 + $0x10] sm:$0xff]
        %v1721 = vld [vmem:[%s1717 + $0x18] sm:$0xff]
        %s1722 = scalar_lea.vmem [#allocation13], 1
        %v1723 = vld [vmem:[%s1722] sm:$0x1]
        %v1725 = vperm.slane %v1723, 0
        %v1728 = vsel %vm998, %v1716, 0
        %1730 = vmatpush.msra.mxu0 0.0
        %1731 = vmatpush.msra.mxu0 0.0
        %1732 = vmatpush.msra.mxu0 0.0
        %1733 = vmatpush.msra.mxu0 0.0
        %1734 = vmatpush.msra.mxu0 0.0
        %1735 = vmatpush.msra.mxu0 0.0
        %1736 = vmatpush.msra.mxu0 0.0
        %1737 = vmatpush.msra.mxu0 0.0
        %1738 = vmatpush.msra.mxu0 0.0
        %1739 = vmatpush.msra.mxu0 0.0
        %1740 = vmatpush.msra.mxu0 0.0
        %1741 = vmatpush.msra.mxu0 0.0
        %1742 = vmatpush.msra.mxu0 %v1721
        %1743 = vmatpush.msra.mxu0 %v1720
        %1744 = vmatpush.msra.mxu0 %v1719
        %1745 = vmatpush.msra.mxu0 %v1718
        %1746 = vmatmul.f32.gmra.mxu0 %v1728
        %v1747 = vpop.f32.mrf.mxu0
        %v1748 = vadd.f32 %v1725, %v1747
        %1749 = vdwg.mxu0
        %v1750 = vmul.f32 %v1748, 0.5
        %v1751 = vmul.f32 %v1748, 0.044715
        %v1752 = vmul.f32 %v1751, %v1748
        %v1753 = vmul.f32 %v1752, %v1748
        %v1754 = vadd.f32 %v1748, %v1753
        %v1755 = vmul.f32 %v1754, 0.7978846
        %v1756 = vtanh.pop %v1755
        %v1757 = vadd.f32 %v1756, 1.0
        %v1758 = vmul.f32 %v1750, %v1757
        %s1759 = scalar_lea.vmem %s13, 64
        %v1760 = vld [vmem:[%s1759] sm:$0xff]
        %v1761 = vld [vmem:[%s1759 + $0x8] sm:$0xff]
        %v1762 = vld [vmem:[%s1759 + $0x10] sm:$0xff]
        %v1763 = vld [vmem:[%s1759 + $0x18] sm:$0xff]
        %v1764 = vld [vmem:[%s1759 + $0x20] sm:$0xff]
        %v1765 = vld [vmem:[%s1759 + $0x28] sm:$0xff]
        %v1766 = vld [vmem:[%s1759 + $0x30] sm:$0xff]
        %v1767 = vld [vmem:[%s1759 + $0x38] sm:$0xff]
        %s1768 = scalar_lea.vmem [#allocation14], 1
        %v1769 = vld [vmem:[%s1768] sm:$0x1]
        %v1771 = vperm.slane %v1769, 0
        %v1774 = vsel %vm1374, %v1758, 0
        %1776 = vmatpush.msra.mxu0 0.0
        %1777 = vmatpush.msra.mxu0 0.0
        %1778 = vmatpush.msra.mxu0 0.0
        %1779 = vmatpush.msra.mxu0 0.0
        %1780 = vmatpush.msra.mxu0 0.0
        %1781 = vmatpush.msra.mxu0 0.0
        %1782 = vmatpush.msra.mxu0 0.0
        %1783 = vmatpush.msra.mxu0 0.0
        %1784 = vmatpush.msra.mxu0 %v1767
        %1785 = vmatpush.msra.mxu0 %v1766
        %1786 = vmatpush.msra.mxu0 %v1765
        %1787 = vmatpush.msra.mxu0 %v1764
        %1788 = vmatpush.msra.mxu0 %v1763
        %1789 = vmatpush.msra.mxu0 %v1762
        %1790 = vmatpush.msra.mxu0 %v1761
        %1791 = vmatpush.msra.mxu0 %v1760
        %1792 = vmatmul.f32.gmra.mxu0 %v1774
        %v1793 = vpop.f32.mrf.mxu0
        %v1794 = vadd.f32 %v1771, %v1793
        %1795 = vdwg.mxu0
        %v1796 = vadd.f32 %v1794, %v1716
        %s1797 = scalar_lea.vmem [#allocation16], 1
        %v1798 = vld [vmem:[%s1797] sm:$0x1]
        %s1799 = scalar_lea.vmem [#allocation17], 1
        %v1800 = vld [vmem:[%s1799] sm:$0x1]
        %v1801 = vsel %vm998, %v1796, 0.0
        %1802 = vadd.xlane.f32.xlu0 %v1801
        %v1803 = vpop.xlane.xlu0 %1802
        %v1804 = vmul.f32 %v1803, %v1008
        %v1805 = vsub.f32 %v1796, %v1804
        %v1806 = vmul.f32 %v1805, %v1805
        %v1807 = vsel %vm998, %v1806, 0.0
        %1808 = vadd.xlane.f32.xlu0 %v1807
        %v1809 = vpop.xlane.xlu0 %1808
        %v1810 = vmul.f32 %v1809, %v1008
        %v1811 = vadd.f32 %v1810, 1e-05
        %v1812 = vrsqrt.pop %v1811
        %v1813 = vmul.f32 %v1812, %v1811
        %v1814 = vmul.f32 %v1813, %v1812
        %v1815 = vmul.f32 0.5, %v1814
        %v1816 = vsub.f32 1.5, %v1815
        %v1817 = vmul.f32 %v1812, %v1816
        %vm1818 = vweird.f32 %v1811
        %vm1819 = vweird.f32 %v1812
        %vm1820 = vmor %vm1818, %vm1819
        %v1821 = vsel %vm1820, %v1812, %v1817
        %v1822 = vmul.f32 %v1805, %v1821
        %v1824 = vperm.slane %v1798, 0
        %v1826 = vmul.f32 %v1822, %v1824
        %v1828 = vperm.slane %v1800, 0
        %v1830 = vadd.f32 %v1826, %v1828
        %v1831 = vld [vmem:[%s17] sm:$0xff]
        %v1832 = vld [vmem:[%s17 + $0x8] sm:$0xff]
        %v1833 = vld [vmem:[%s17 + $0x10] sm:$0xff]
        %v1834 = vld [vmem:[%s17 + $0x18] sm:$0xff]
        %v1835 = vld [vmem:[#allocation19] sm:$0x1]
        %v1837 = vperm.slane %v1835, 0
        %v1840 = vsel %vm998, %v1830, 0
        %1842 = vmatpush.msra.mxu0 0.0
        %1843 = vmatpush.msra.mxu0 0.0
        %1844 = vmatpush.msra.mxu0 0.0
        %1845 = vmatpush.msra.mxu0 0.0
        %1846 = vmatpush.msra.mxu0 0.0
        %1847 = vmatpush.msra.mxu0 0.0
        %1848 = vmatpush.msra.mxu0 0.0
        %1849 = vmatpush.msra.mxu0 0.0
        %1850 = vmatpush.msra.mxu0 0.0
        %1851 = vmatpush.msra.mxu0 0.0
        %1852 = vmatpush.msra.mxu0 0.0
        %1853 = vmatpush.msra.mxu0 0.0
        %1854 = vmatpush.msra.mxu0 %v1834
        %1855 = vmatpush.msra.mxu0 %v1833
        %1856 = vmatpush.msra.mxu0 %v1832
        %1857 = vmatpush.msra.mxu0 %v1831
        %1858 = vmatmul.f32.gmra.mxu0 %v1840
        %v1859 = vpop.f32.mrf.mxu0
        %v1860 = vadd.f32 %v1837, %v1859
        %1861 = vdwg.mxu0
        %v1862 = vmul.f32 %v1860, 0.5
        %v1863 = vmul.f32 %v1860, 0.044715
        %v1864 = vmul.f32 %v1863, %v1860
        %v1865 = vmul.f32 %v1864, %v1860
        %v1866 = vadd.f32 %v1860, %v1865
        %v1867 = vmul.f32 %v1866, 0.7978846
        %v1868 = vtanh.pop %v1867
        %v1869 = vadd.f32 %v1868, 1.0
        %v1870 = vmul.f32 %v1862, %v1869
        %v1871 = vld [vmem:[#allocation20] sm:$0x1]
        %v1872 = vld [vmem:[#allocation22] sm:$0x1]
        %v1873 = vsel %vm998, %v1870, 0.0
        %1874 = vadd.xlane.f32.xlu0 %v1873
        %v1875 = vpop.xlane.xlu0 %1874
        %v1876 = vmul.f32 %v1875, %v1008
        %v1877 = vsub.f32 %v1870, %v1876
        %v1878 = vmul.f32 %v1877, %v1877
        %v1879 = vsel %vm998, %v1878, 0.0
        %1880 = vadd.xlane.f32.xlu0 %v1879
        %v1881 = vpop.xlane.xlu0 %1880
        %v1882 = vmul.f32 %v1881, %v1008
        %v1883 = vadd.f32 %v1882, 1e-05
        %v1884 = vrsqrt.pop %v1883
        %v1885 = vmul.f32 %v1884, %v1883
        %v1886 = vmul.f32 %v1885, %v1884
        %v1887 = vmul.f32 0.5, %v1886
        %v1888 = vsub.f32 1.5, %v1887
        %v1889 = vmul.f32 %v1884, %v1888
        %vm1890 = vweird.f32 %v1883
        %vm1891 = vweird.f32 %v1884
        %vm1892 = vmor %vm1890, %vm1891
        %v1893 = vsel %vm1892, %v1884, %v1889
        %v1894 = vmul.f32 %v1877, %v1893
        %v1896 = vperm.slane %v1871, 0
        %v1898 = vmul.f32 %v1894, %v1896
        %v1900 = vperm.slane %v1872, 0
        %v1902 = vadd.f32 %v1898, %v1900
        %v1903 = vld [vmem:[%s21] sm:$0xff]
        %v1904 = vld [vmem:[%s21 + $0x8] sm:$0xff]
        %v1905 = vld [vmem:[%s21 + $0x10] sm:$0xff]
        %v1906 = vld [vmem:[%s21 + $0x18] sm:$0xff]
        %v1907 = vld [vmem:[#allocation23] sm:$0x1]
        %v1909 = vperm.slane %v1907, 0
        %v1912 = vsel %vm998, %v1902, 0
        %1914 = vmatpush.msra.mxu0 0.0
        %1915 = vmatpush.msra.mxu0 0.0
        %1916 = vmatpush.msra.mxu0 0.0
        %1917 = vmatpush.msra.mxu0 0.0
        %1918 = vmatpush.msra.mxu0 0.0
        %1919 = vmatpush.msra.mxu0 0.0
        %1920 = vmatpush.msra.mxu0 0.0
        %1921 = vmatpush.msra.mxu0 0.0
        %1922 = vmatpush.msra.mxu0 0.0
        %1923 = vmatpush.msra.mxu0 0.0
        %1924 = vmatpush.msra.mxu0 0.0
        %1925 = vmatpush.msra.mxu0 0.0
        %1926 = vmatpush.msra.mxu0 %v1906
        %1927 = vmatpush.msra.mxu0 %v1905
        %1928 = vmatpush.msra.mxu0 %v1904
        %1929 = vmatpush.msra.mxu0 %v1903
        %1930 = vmatmul.f32.gmra.mxu0 %v1912
        %v1931 = vpop.f32.mrf.mxu0
        %v1932 = vadd.f32 %v1909, %v1931
        %1933 = vdwg.mxu0
        %1934 = vst [vmem:[%s973] sm:$0xff] %v1932
        %v1935 = vld [vmem:[%s990] sm:$0xff]
        %1936 = vmax.xlane.f32.xlu0 %v1932
        %v1937 = vpop.xlane.xlu0 %1936
        %v1938 = vsub.f32 %v1932, %v1937
        %v1939 = vmul.f32 %v1938, 1.442695
        %v1940 = vpow.pop %v1939
        %1941 = vadd.xlane.f32.xlu0 %v1940
        %v1942 = vpop.xlane.xlu0 %1941
        %v1943 = vlog2.pop %v1942
        %v1944 = vmul.f32 %v1943, 0.6931472
        %v1945 = vadd.f32 %v1944, %v1937
        %v1946 = vsub.f32 %v1932, %v1945
        %v1947 = vlaneseq
        %v1948 = vand.u32 %v1947, 127
        %1949 = vset.pattern.permute.xlu0 0
        %1950 = vperm.xlu0 %1949, %v1935
        %v1951 = vpop.permute.xlu0 %1950
        %vm1952 = vcmp.eq.s32.totalorder %v1948, %v1951
        %v1953 = vsel %vm1952, 1, 0
        %v1954 = vcvt.s32.f32 %v1953
        %v1955 = vmul.f32 %v1946, %v1954
        %1956 = vadd.xlane.f32.xlu0 %v1955
        %v1957 = vpop.xlane.xlu0 %1956
        %v1958 = vsub.f32 0.0, %v1957
        %vm1959 = vcmask 7168
        %1960 = vst.msk [vmem:[%s994] sm:$0xff] %vm1959, %v1958
        %s1961 = sand.u32 %s553, 1
        %s1962 = scalar_lea.sflag [#allocation4], %s1961
        %s1963 = sand.u32 %s553, 1
        %s1964 = smul.addr %s1963, 8
        %s1965 = scalar_lea.vmem [#allocation25], %s1964
        %p1966 = scmp.lt.s32.totalorder %s47, 1
        %s1967 = scalar_select %p1966, %s47, 1
        %s1968 = smul.addr %s1967, 8
        %s1969 = scalar_lea.vmem %s24, %s1968
        // Predicated region
        $region169: #{inversion_plm_forward.1} parent=111 // pred_check
          %p1970 = pneg %p563
        $region170: #{inversion_plm_forward.1} parent=111 // pred_check_branch
          %1972 = sbr.rel (%p1970) target = $region172
        $region171: #{inversion_plm_forward.1} parent=111 // pred_region
          %1974 = vsyncadd %s1962, 0
          %s1975 = smul.addr %s47, 8
          %s1976 = scalar_lea.hbm %s23, %s1975
          %s1978 = sshll.u32 %s1965, 4
          %s1979 = int_to_ptr.vmem [resolvable:$true] %s1978
          %s1980 = sshll.u32 %s1976, 4
          %s1981 = int_to_ptr.hbm [resolvable:$true] %s1980
          %1983 = dma.vmem_to_hbm [thread:$0]  %s1979, 128, %s1981, %s1962
        $region172: #{inversion_plm_forward.1} parent=111 // pred_fallthru
          _
        // Predicated region
        $region173: #{inversion_plm_forward.1} parent=111 // pred_check
          %p1984 = pneg %p589
        $region174: #{inversion_plm_forward.1} parent=111 // pred_check_branch
          %1986 = sbr.rel (%p1984) target = $region176
        $region175: #{inversion_plm_forward.1} parent=111 // pred_region
          _
        $region176: #{inversion_plm_forward.1} parent=111 // pred_fallthru
          _
      $region112: #{inversion_plm_forward.1} parent=5 // pred_fallthru
        _
      %p1987 = scmp.le.s32.totalorder 2, %s42
      // Predicated region
      $region177: #{inversion_plm_forward.1} parent=5 // pred_check
        %p1988 = pneg %p1987
      $region178: #{inversion_plm_forward.1} parent=5 // pred_check_branch
        %1990 = sbr.rel (%p1988) target = $region180
      $region179: #{inversion_plm_forward.1} parent=5 // pred_region
        %s1991 = ssub.s32 %s42, 2
        // Predicated region
        $region181: #{inversion_plm_forward.1} parent=179 // pred_check
          %p1992 = pneg %p569
        $region182: #{inversion_plm_forward.1} parent=179 // pred_check_branch
          %1994 = sbr.rel (%p1992) target = $region184
        $region183: #{inversion_plm_forward.1} parent=179 // pred_region
          %s1995 = sand.u32 %s554, 1
          %s1996 = scalar_lea.sflag [#allocation4], %s1995
          %s1997 = sand.u32 %s554, 1
          %s1998 = smul.addr %s1997, 8
          %s1999 = scalar_lea.vmem [#allocation25], %s1998
          %2001 = dma.done %s1996, 128
        $region184: #{inversion_plm_forward.1} parent=179 // pred_fallthru
          _
        // Predicated region
        $region185: #{inversion_plm_forward.1} parent=179 // pred_check
          %p2002 = pneg %p595
        $region186: #{inversion_plm_forward.1} parent=179 // pred_check_branch
          %2004 = sbr.rel (%p2002) target = $region188
        $region187: #{inversion_plm_forward.1} parent=179 // pred_region
          %p2005 = scmp.lt.s32.totalorder %s48, 1
          %s2006 = scalar_select %p2005, %s48, 1
          %s2007 = smul.addr %s2006, 8
          %s2008 = scalar_lea.vmem %s24, %s2007
        $region188: #{inversion_plm_forward.1} parent=179 // pred_fallthru
          _
      $region180: #{inversion_plm_forward.1} parent=5 // pred_fallthru
        _
    $region6: #{inversion_plm_forward.1} parent=1 // loop_footer
      %s46 = sadd.s32 1, %s42
    $region7: #{inversion_plm_forward.1} parent=1 // loop_footer_branch
      %41 = sbr.rel target = $region3
    $region8: #{inversion_plm_forward.1} parent=1 // loop_exit
      _
    %2009 = vsyncpa [#allocation3], 1
    %s2010 = scalar_lea.sflag [#allocation3], 1
    %2011 = vsyncpa %s2010, 1
    %2012 = vsyncpa [#allocation6], 1
    %2013 = vsyncpa [#allocation9], 1
    %2014 = vsyncpa [#allocation12], 1
    %2015 = vsyncpa [#allocation15], 1
    %2016 = vsyncpa [#allocation18], 1
    %2017 = vsyncpa [#allocation21], 1
    %2018 = vsyncpa [#allocation24], 1
    %2019 = vsyncpa [#allocation4], 1
    %s2020 = scalar_lea.sflag [#allocation4], 1
    %2021 = vsyncpa %s2020, 1

</llo_original>
